<compile_context>
chip_gen: v7x
topology: tpu7x:2x2x1
jax: 0.10.0
libtpu: 0.0.40
codegen_flags: <defaults>
</compile_context>

<pallas_src>
import jax
import jax.numpy as jnp
from jax.experimental import pallas as pl
from jax.experimental.pallas import tpu as pltpu

# ---------------------------------------------------------------------------
# Module hyper-parameters (from Cost.__init__ defaults)
# ---------------------------------------------------------------------------
DECAY_FACTOR = 0.97
VEHICLE_WIDTH = 2.1
VEHICLE_LENGTH = 4.9
PIXELS_PER_METER = 5.0
LIGHT_OFFSET_X = 12.0
LIGHT_OFFSET_Y = 3.25
MASK_ALPHA = 1.1


# ---------------------------------------------------------------------------
# Glue helper (plain JAX) -- reconstruction of the external rotate_batched
# ---------------------------------------------------------------------------
def rotate_batched(location, yaw):
    """Express future ego poses (t = 1..T) in the ego frame of t = 0."""
    loc0 = location[:, 0:1, :2]                       # (B, 1, 2)
    yaw0 = yaw[:, 0:1, 0]                             # (B, 1)
    d = location[:, 1:, :2] - loc0                    # (B, T, 2)
    c = jnp.cos(yaw0)
    s = jnp.sin(yaw0)
    x = c * d[..., 0] + s * d[..., 1]                 # (B, T)
    y = -s * d[..., 0] + c * d[..., 1]                # (B, T)
    yaw_ = yaw[:, 1:, 0] - yaw0                       # (B, T)
    return x, y, yaw_


# ---------------------------------------------------------------------------
# Pallas kernel: per (b_block, t) -> masks (tB, HW) + 7 cost contributions
# ---------------------------------------------------------------------------
def _cost_kernel(decay_ref, cx_ref, cy_ref, ego_ref, bev_ref,
                 mcar_ref, mside_ref, mlight_ref, costs_ref):
    t = pl.program_id(1)
    decay = decay_ref[t]                              # scalar from SMEM

    # Per-(b, t) ego parameters, one row per batch item of this block.
    ego = ego_ref[:, 0, 0, :]                         # (tB, 8)
    x = ego[:, 0:1]                                   # (tB, 1)
    y = ego[:, 1:2]
    c = ego[:, 2:3]                                   # cos(yaw)
    s = ego[:, 3:4]                                   # sin(yaw)
    dy = ego[:, 4:5]                                  # speed + L
    dy_l = ego[:, 5:6]                                # 0.5*speed + 3L

    cx = cx_ref[...]                                  # (1, HW) lateral coords
    cy = cy_ref[...]                                  # (1, HW) longitudinal coords

    # Ego-aligned coordinates (broadcast (1,HW) x (tB,1) -> (tB,HW)).
    tx = cx - x
    ty = cy - y
    ax = c * tx + s * ty
    ay = -s * tx + c * ty

    # Traffic-light frame (offset applied before rotation).
    txl = tx - LIGHT_OFFSET_X
    tyl = ty - LIGHT_OFFSET_Y
    axl = c * txl + s * tyl
    ayl = -s * txl + c * tyl

    dx = VEHICLE_WIDTH / 3.0 + 1.0
    dx_l = VEHICLE_WIDTH + 1.0

    sig = jax.nn.sigmoid
    A = MASK_ALPHA
    # Soft rectangular footprints (6 sigmoids total: light mask only needs 2).
    mask_car = sig(A * (dx - jnp.abs(ax))) * sig(A * (dy - jnp.abs(ay)))
    mask_side = (sig(A * (VEHICLE_WIDTH * 0.5 - jnp.abs(ax))) *
                 sig(A * (VEHICLE_LENGTH * 0.5 - jnp.abs(ay))))
    mask_light = sig(A * (dx_l - jnp.abs(axl))) * sig(A * (dy_l - jnp.abs(ayl)))

    mcar_ref[:, 0, 0, :] = mask_car
    mside_ref[:, 0, 0, :] = mask_side
    mlight_ref[:, 0, 0, :] = mask_light

    # Fused binarize + mask + reduce. Channels 1..7 of the original BEV.
    def wsum(ci, mask):
        ch = bev_ref[:, 0, ci, :]                     # (tB, HW)
        return jnp.sum(jnp.where(ch > 0.5, mask, 0.0), keepdims=True)  # (1,1)

    zero = jnp.zeros((1, 1), jnp.float32)
    costs = jnp.concatenate(
        [
            wsum(1, mask_side),    # lane
            wsum(2, mask_car),     # vehicle
            wsum(3, mask_light),   # green light
            wsum(4, mask_light),   # yellow light
            wsum(5, mask_light),   # red light
            wsum(6, mask_car),     # pedestrian
            wsum(7, mask_side),    # offroad
            zero,                  # pad to 8
        ],
        axis=0,
    ) * decay                                          # (8, 1)
    costs_ref[0, 0] = costs


# ---------------------------------------------------------------------------
# Wrapper (Cost.forward)
# ---------------------------------------------------------------------------
def cost_forward(location, yaw, speed, bev):
    location = jnp.asarray(location, jnp.float32)
    yaw = jnp.asarray(yaw, jnp.float32)
    speed = jnp.asarray(speed, jnp.float32)
    bev = jnp.asarray(bev, jnp.float32)

    B, Tp1, C, H, W = bev.shape
    T = Tp1 - 1
    HW = H * W
    assert C >= 8, "BEV must have at least 8 channels"

    # Ego trajectory in the t=0 frame.
    x, y, yaw_ = rotate_batched(location, yaw)                     # (B, T)
    speed_ = speed[:, 1:, 0]                                       # (B, T)
    cosy = jnp.cos(yaw_)
    siny = jnp.sin(yaw_)
    dy = speed_ + VEHICLE_LENGTH
    dy_light = speed_ * 0.5 + VEHICLE_LENGTH * 3.0
    zeros = jnp.zeros_like(x)
    ego = jnp.stack([x, y, cosy, siny, dy, dy_light, zeros, zeros],
                    axis=-1).reshape(B, T, 1, 8)                   # (B, T, 1, 8)

    decay = DECAY_FACTOR ** jnp.arange(T, dtype=jnp.float32)       # (T,) SMEM

    # Ego-centric metric coordinate grid (precomputed once, like __init__).
    col = jnp.arange(W, dtype=jnp.float32)
    row = jnp.arange(H, dtype=jnp.float32)
    coord_x = jnp.broadcast_to(
        (col - (W - 1) * 0.5)[None, :] / PIXELS_PER_METER, (H, W)).reshape(1, HW)
    coord_y = jnp.broadcast_to(
        (((H - 1) * 0.5 - row) / PIXELS_PER_METER)[:, None], (H, W)).reshape(1, HW)

    # Free reshape (contiguous) -- no HBM copy of the BEV.
    bev_flat = bev.reshape(B, Tp1, C, HW)

    # Batch tile: biggest divisor of B in {8,4,2,1}, capped so the bev block
    # stays modest in VMEM (double-buffered) even for large BEVs.
    tB = 1
    for cand in (8, 4, 2):
        if B % cand == 0:
            tB = cand
            break
    while tB > 1 and tB * 8 * HW * 4 > 8 * 1024 * 1024:
        tB //= 2
    Bb = B // tB

    mask_out_shape = jax.ShapeDtypeStruct((B, T, 1, HW), jnp.float32)
    out_shape = (
        mask_out_shape, mask_out_shape, mask_out_shape,
        jax.ShapeDtypeStruct((Bb, T, 8, 1), jnp.float32),
    )
    mask_spec = pl.BlockSpec((tB, 1, 1, HW), lambda b, t: (b, t, 0, 0))

    grid_spec = pltpu.PrefetchScalarGridSpec(
        num_scalar_prefetch=0,
        grid=(Bb, T),
        in_specs=[
            pl.BlockSpec(memory_space=pltpu.MemorySpace.SMEM),           # decay (T,)
            pl.BlockSpec((1, HW), lambda b, t: (0, 0)),                  # coord_x
            pl.BlockSpec((1, HW), lambda b, t: (0, 0)),                  # coord_y
            pl.BlockSpec((tB, 1, 1, 8), lambda b, t: (b, t, 0, 0)),      # ego
            # full BEV; time shift (+1) and channel window 0..7 via index_map
            pl.BlockSpec((tB, 1, 8, HW), lambda b, t: (b, t + 1, 0, 0)),
        ],
        out_specs=[
            mask_spec, mask_spec, mask_spec,
            pl.BlockSpec((1, 1, 8, 1), lambda b, t: (b, t, 0, 0)),
        ],
    )

    mask_car, mask_side, mask_light, costs_bt = pl.pallas_call(
        _cost_kernel,
        grid_spec=grid_spec,
        out_shape=out_shape,
        compiler_params=pltpu.CompilerParams(
            dimension_semantics=("parallel", "parallel"),
            vmem_limit_bytes=64 * 1024 * 1024),
    )(decay, coord_x, coord_y, ego, bev_flat)

    costs = jnp.sum(costs_bt, axis=(0, 1, 3))          # (8,)
    mask_car = mask_car.reshape(B, T, H, W)
    mask_side = mask_side.reshape(B, T, H, W)
    mask_light = mask_light.reshape(B, T, H, W)

    return {
        "lane_cost": costs[0],
        "vehicle_cost": costs[1],
        "green_light_cost": costs[2],
        "yellow_light_cost": costs[3],
        "red_light_cost": costs[4],
        "pedestrian_cost": costs[5],
        "offroad_cost": costs[6],
        "mask_car": mask_car,
        "mask_side": mask_side,
        "mask_light": mask_light,
    }


# ---------------------------------------------------------------------------
# Pure-JAX reference (same reconstructed math) for validation
# ---------------------------------------------------------------------------
def reference_cost(location, yaw, speed, bev):
    location = jnp.asarray(location, jnp.float32)
    yaw = jnp.asarray(yaw, jnp.float32)
    speed = jnp.asarray(speed, jnp.float32)
    bev = jnp.asarray(bev, jnp.float32)

    B, Tp1, C, H, W = bev.shape
    T = Tp1 - 1
    x, y, yaw_ = rotate_batched(location, yaw)
    speed_ = speed[:, 1:, 0]

    row = jnp.arange(H, dtype=jnp.float32)[:, None] + jnp.zeros((1, W), jnp.float32)
    col = jnp.zeros((H, 1), jnp.float32) + jnp.arange(W, dtype=jnp.float32)[None, :]
    coord_x = (col - (W - 1) * 0.5) / PIXELS_PER_METER
    coord_y = ((H - 1) * 0.5 - row) / PIXELS_PER_METER

    def align(px, py, pyaw):
        c = jnp.cos(pyaw)[..., None, None]
        s = jnp.sin(pyaw)[..., None, None]
        tx = coord_x[None, None] - px[..., None, None]
        ty = coord_y[None, None] - py[..., None, None]
        return c * tx + s * ty, -s * tx + c * ty

    ax, ay = align(x, y, yaw_)
    axl, ayl = align(x + LIGHT_OFFSET_X, y + LIGHT_OFFSET_Y, yaw_)

    dx = VEHICLE_WIDTH / 3.0 + 1.0
    dx_light = VEHICLE_WIDTH + 1.0
    dy = (speed_ + VEHICLE_LENGTH)[..., None, None]
    dy_light = (speed_ * 0.5 + VEHICLE_LENGTH * 3.0)[..., None, None]

    sig = jax.nn.sigmoid
    A = MASK_ALPHA
    mask_car = sig(A * (dx - jnp.abs(ax))) * sig(A * (dy - jnp.abs(ay)))
    mask_side = (sig(A * (VEHICLE_WIDTH * 0.5 - jnp.abs(ax))) *
                 sig(A * (VEHICLE_LENGTH * 0.5 - jnp.abs(ay))))
    mask_light = sig(A * (dx_light - jnp.abs(axl))) * sig(A * (dy_light - jnp.abs(ayl)))

    bevb = jnp.where(bev[:, 1:] > 0.5, 1.0, 0.0)
    decay = (DECAY_FACTOR ** jnp.arange(T, dtype=jnp.float32))[None, :, None, None]

    return {
        "lane_cost": jnp.sum(bevb[:, :, 1] * mask_side * decay),
        "vehicle_cost": jnp.sum(bevb[:, :, 2] * mask_car * decay),
        "green_light_cost": jnp.sum(bevb[:, :, 3] * mask_light * decay),
        "yellow_light_cost": jnp.sum(bevb[:, :, 4] * mask_light * decay),
        "red_light_cost": jnp.sum(bevb[:, :, 5] * mask_light * decay),
        "pedestrian_cost": jnp.sum(bevb[:, :, 6] * mask_car * decay),
        "offroad_cost": jnp.sum(bevb[:, :, 7] * mask_side * decay),
        "mask_car": mask_car,
        "mask_side": mask_side,
        "mask_light": mask_light,
    }


if __name__ == "__main__":
    key = jax.random.PRNGKey(0)
    B, Tp1, C, H, W = 8, 9, 8, 16, 16
    k1, k2, k3, k4 = jax.random.split(key, 4)
    location = jax.random.normal(k1, (B, Tp1, 2), dtype=jnp.float32) * 2.0
    yaw = jax.random.normal(k2, (B, Tp1, 1), dtype=jnp.float32) * 0.3
    speed = jax.random.uniform(k3, (B, Tp1, 1), dtype=jnp.float32) * 5.0
    bev = jax.random.uniform(k4, (B, Tp1, C, H, W), dtype=jnp.float32)

    out = jax.block_until_ready(cost_forward(location, yaw, speed, bev))
    ref = reference_cost(location, yaw, speed, bev)

    for name in ["lane_cost", "vehicle_cost", "green_light_cost", "yellow_light_cost",
                 "red_light_cost", "pedestrian_cost", "offroad_cost"]:
        assert jnp.allclose(out[name], ref[name], rtol=2e-4, atol=1e-3), name
    for name in ["mask_car", "mask_side", "mask_light"]:
        assert jnp.allclose(out[name], ref[name], rtol=1e-4, atol=1e-4), name

    print("KERNEL_OK")
</pallas_src>

<mosaic_0001>
module attributes {stable_mosaic.version = 11 : i64} {
  func.func @_cost_kernel(%arg0: i32, %arg1: i32, %arg2: memref<8xf32, #tpu.memory_space<smem>>, %arg3: memref<1x256xf32, #tpu.memory_space<vmem>>, %arg4: memref<1x256xf32, #tpu.memory_space<vmem>>, %arg5: memref<8x1x1x8xf32, #tpu.memory_space<vmem>>, %arg6: memref<8x1x8x256xf32, #tpu.memory_space<vmem>>, %arg7: memref<8x1x1x256xf32, #tpu.memory_space<vmem>>, %arg8: memref<8x1x1x256xf32, #tpu.memory_space<vmem>>, %arg9: memref<8x1x1x256xf32, #tpu.memory_space<vmem>>, %arg10: memref<1x1x8x1xf32, #tpu.memory_space<vmem>>) attributes {dimension_semantics = [#tpu.dimension_semantics<parallel>, #tpu.dimension_semantics<parallel>], iteration_bounds = array<i64: 1, 8>, scalar_prefetch = 0 : i64, scratch_operands = 0 : i64, tpu.core_type = #tpu.core_type<tc>, window_params = [{transform_indices = @transform_0, window_bounds = array<i64: 8>}, {pipeline_mode = #tpu.pipeline_mode<synchronous>, transform_indices = @transform_1, window_bounds = array<i64: 1, 256>}, {pipeline_mode = #tpu.pipeline_mode<synchronous>, transform_indices = @transform_2, window_bounds = array<i64: 1, 256>}, {transform_indices = @transform_3, window_bounds = array<i64: 8, 1, 1, 8>}, {transform_indices = @transform_4, window_bounds = array<i64: 8, 1, 8, 256>}, {transform_indices = @transform_5, window_bounds = array<i64: 8, 1, 1, 256>}, {transform_indices = @transform_6, window_bounds = array<i64: 8, 1, 1, 256>}, {transform_indices = @transform_7, window_bounds = array<i64: 8, 1, 1, 256>}, {transform_indices = @transform_8, window_bounds = array<i64: 1, 1, 8, 1>}]} {
    %0 = arith.index_cast %arg1 : i32 to index
    %1 = memref.load %arg2[%0] : memref<8xf32, #tpu.memory_space<smem>>
    %c0 = arith.constant 0 : index
    %c0_0 = arith.constant 0 : index
    %c0_1 = arith.constant 0 : index
    %c0_2 = arith.constant 0 : index
    %2 = vector.load %arg5[%c0, %c0_0, %c0_1, %c0_2] : memref<8x1x1x8xf32, #tpu.memory_space<vmem>>, vector<8x1x1x8xf32>
    %3 = vector.shape_cast %2 : vector<8x1x1x8xf32> to vector<8x8xf32>
    %4 = vector.extract_strided_slice %3 {offsets = [0, 0], sizes = [8, 1], strides = [1, 1]} : vector<8x8xf32> to vector<8x1xf32>
    %5 = vector.extract_strided_slice %3 {offsets = [0, 1], sizes = [8, 1], strides = [1, 1]} : vector<8x8xf32> to vector<8x1xf32>
    %6 = vector.extract_strided_slice %3 {offsets = [0, 2], sizes = [8, 1], strides = [1, 1]} : vector<8x8xf32> to vector<8x1xf32>
    %7 = vector.extract_strided_slice %3 {offsets = [0, 3], sizes = [8, 1], strides = [1, 1]} : vector<8x8xf32> to vector<8x1xf32>
    %8 = vector.extract_strided_slice %3 {offsets = [0, 4], sizes = [8, 1], strides = [1, 1]} : vector<8x8xf32> to vector<8x1xf32>
    %9 = vector.extract_strided_slice %3 {offsets = [0, 5], sizes = [8, 1], strides = [1, 1]} : vector<8x8xf32> to vector<8x1xf32>
    %c0_3 = arith.constant 0 : index
    %c0_4 = arith.constant 0 : index
    %10 = vector.load %arg3[%c0_3, %c0_4] : memref<1x256xf32, #tpu.memory_space<vmem>>, vector<1x256xf32>
    %c0_5 = arith.constant 0 : index
    %c0_6 = arith.constant 0 : index
    %11 = vector.load %arg4[%c0_5, %c0_6] : memref<1x256xf32, #tpu.memory_space<vmem>>, vector<1x256xf32>
    %12 = vector.broadcast %10 : vector<1x256xf32> to vector<8x256xf32>
    %13 = vector.broadcast %4 : vector<8x1xf32> to vector<8x256xf32>
    %14 = arith.subf %12, %13 : vector<8x256xf32>
    %15 = vector.broadcast %11 : vector<1x256xf32> to vector<8x256xf32>
    %16 = vector.broadcast %5 : vector<8x1xf32> to vector<8x256xf32>
    %17 = arith.subf %15, %16 : vector<8x256xf32>
    %18 = vector.broadcast %6 : vector<8x1xf32> to vector<8x256xf32>
    %19 = arith.mulf %18, %14 : vector<8x256xf32>
    %20 = vector.broadcast %7 : vector<8x1xf32> to vector<8x256xf32>
    %21 = arith.mulf %20, %17 : vector<8x256xf32>
    %22 = arith.addf %19, %21 : vector<8x256xf32>
    %cst = arith.constant 0.000000e+00 : f32
    %23 = vector.broadcast %cst : f32 to vector<8x1xf32>
    %24 = arith.subf %23, %7 : vector<8x1xf32>
    %25 = vector.broadcast %24 : vector<8x1xf32> to vector<8x256xf32>
    %26 = arith.mulf %25, %14 : vector<8x256xf32>
    %27 = vector.broadcast %6 : vector<8x1xf32> to vector<8x256xf32>
    %28 = arith.mulf %27, %17 : vector<8x256xf32>
    %29 = arith.addf %26, %28 : vector<8x256xf32>
    %cst_7 = arith.constant 1.200000e+01 : f32
    %30 = vector.broadcast %cst_7 : f32 to vector<8x256xf32>
    %31 = arith.subf %14, %30 : vector<8x256xf32>
    %cst_8 = arith.constant 3.250000e+00 : f32
    %32 = vector.broadcast %cst_8 : f32 to vector<8x256xf32>
    %33 = arith.subf %17, %32 : vector<8x256xf32>
    %34 = vector.broadcast %6 : vector<8x1xf32> to vector<8x256xf32>
    %35 = arith.mulf %34, %31 : vector<8x256xf32>
    %36 = vector.broadcast %7 : vector<8x1xf32> to vector<8x256xf32>
    %37 = arith.mulf %36, %33 : vector<8x256xf32>
    %38 = arith.addf %35, %37 : vector<8x256xf32>
    %cst_9 = arith.constant 0.000000e+00 : f32
    %39 = vector.broadcast %cst_9 : f32 to vector<8x1xf32>
    %40 = arith.subf %39, %7 : vector<8x1xf32>
    %41 = vector.broadcast %40 : vector<8x1xf32> to vector<8x256xf32>
    %42 = arith.mulf %41, %31 : vector<8x256xf32>
    %43 = vector.broadcast %6 : vector<8x1xf32> to vector<8x256xf32>
    %44 = arith.mulf %43, %33 : vector<8x256xf32>
    %45 = arith.addf %42, %44 : vector<8x256xf32>
    %46 = math.absf %22 : vector<8x256xf32>
    %cst_10 = arith.constant 1.700000e+00 : f32
    %47 = vector.broadcast %cst_10 : f32 to vector<8x256xf32>
    %48 = arith.subf %47, %46 : vector<8x256xf32>
    %cst_11 = arith.constant 1.100000e+00 : f32
    %49 = vector.broadcast %cst_11 : f32 to vector<8x256xf32>
    %50 = arith.mulf %49, %48 : vector<8x256xf32>
    %51 = arith.negf %50 : vector<8x256xf32>
    %52 = math.exp %51 : vector<8x256xf32>
    %cst_12 = arith.constant 1.000000e+00 : f32
    %53 = vector.broadcast %cst_12 : f32 to vector<8x256xf32>
    %54 = arith.addf %53, %52 : vector<8x256xf32>
    %55 = arith.divf %53, %54 : vector<8x256xf32>
    %56 = math.absf %29 : vector<8x256xf32>
    %57 = vector.broadcast %8 : vector<8x1xf32> to vector<8x256xf32>
    %58 = arith.subf %57, %56 : vector<8x256xf32>
    %cst_13 = arith.constant 1.100000e+00 : f32
    %59 = vector.broadcast %cst_13 : f32 to vector<8x256xf32>
    %60 = arith.mulf %59, %58 : vector<8x256xf32>
    %61 = arith.negf %60 : vector<8x256xf32>
    %62 = math.exp %61 : vector<8x256xf32>
    %cst_14 = arith.constant 1.000000e+00 : f32
    %63 = vector.broadcast %cst_14 : f32 to vector<8x256xf32>
    %64 = arith.addf %63, %62 : vector<8x256xf32>
    %65 = arith.divf %63, %64 : vector<8x256xf32>
    %66 = arith.mulf %55, %65 : vector<8x256xf32>
    %67 = math.absf %22 : vector<8x256xf32>
    %cst_15 = arith.constant 1.050000e+00 : f32
    %68 = vector.broadcast %cst_15 : f32 to vector<8x256xf32>
    %69 = arith.subf %68, %67 : vector<8x256xf32>
    %cst_16 = arith.constant 1.100000e+00 : f32
    %70 = vector.broadcast %cst_16 : f32 to vector<8x256xf32>
    %71 = arith.mulf %70, %69 : vector<8x256xf32>
    %72 = arith.negf %71 : vector<8x256xf32>
    %73 = math.exp %72 : vector<8x256xf32>
    %cst_17 = arith.constant 1.000000e+00 : f32
    %74 = vector.broadcast %cst_17 : f32 to vector<8x256xf32>
    %75 = arith.addf %74, %73 : vector<8x256xf32>
    %76 = arith.divf %74, %75 : vector<8x256xf32>
    %77 = math.absf %29 : vector<8x256xf32>
    %cst_18 = arith.constant 2.450000e+00 : f32
    %78 = vector.broadcast %cst_18 : f32 to vector<8x256xf32>
    %79 = arith.subf %78, %77 : vector<8x256xf32>
    %cst_19 = arith.constant 1.100000e+00 : f32
    %80 = vector.broadcast %cst_19 : f32 to vector<8x256xf32>
    %81 = arith.mulf %80, %79 : vector<8x256xf32>
    %82 = arith.negf %81 : vector<8x256xf32>
    %83 = math.exp %82 : vector<8x256xf32>
    %cst_20 = arith.constant 1.000000e+00 : f32
    %84 = vector.broadcast %cst_20 : f32 to vector<8x256xf32>
    %85 = arith.addf %84, %83 : vector<8x256xf32>
    %86 = arith.divf %84, %85 : vector<8x256xf32>
    %87 = arith.mulf %76, %86 : vector<8x256xf32>
    %88 = math.absf %38 : vector<8x256xf32>
    %cst_21 = arith.constant 3.100000e+00 : f32
    %89 = vector.broadcast %cst_21 : f32 to vector<8x256xf32>
    %90 = arith.subf %89, %88 : vector<8x256xf32>
    %cst_22 = arith.constant 1.100000e+00 : f32
    %91 = vector.broadcast %cst_22 : f32 to vector<8x256xf32>
    %92 = arith.mulf %91, %90 : vector<8x256xf32>
    %93 = arith.negf %92 : vector<8x256xf32>
    %94 = math.exp %93 : vector<8x256xf32>
    %cst_23 = arith.constant 1.000000e+00 : f32
    %95 = vector.broadcast %cst_23 : f32 to vector<8x256xf32>
    %96 = arith.addf %95, %94 : vector<8x256xf32>
    %97 = arith.divf %95, %96 : vector<8x256xf32>
    %98 = math.absf %45 : vector<8x256xf32>
    %99 = vector.broadcast %9 : vector<8x1xf32> to vector<8x256xf32>
    %100 = arith.subf %99, %98 : vector<8x256xf32>
    %cst_24 = arith.constant 1.100000e+00 : f32
    %101 = vector.broadcast %cst_24 : f32 to vector<8x256xf32>
    %102 = arith.mulf %101, %100 : vector<8x256xf32>
    %103 = arith.negf %102 : vector<8x256xf32>
    %104 = math.exp %103 : vector<8x256xf32>
    %cst_25 = arith.constant 1.000000e+00 : f32
    %105 = vector.broadcast %cst_25 : f32 to vector<8x256xf32>
    %106 = arith.addf %105, %104 : vector<8x256xf32>
    %107 = arith.divf %105, %106 : vector<8x256xf32>
    %108 = arith.mulf %97, %107 : vector<8x256xf32>
    %c0_26 = arith.constant 0 : index
    %c0_27 = arith.constant 0 : index
    %c0_28 = arith.constant 0 : index
    %c0_29 = arith.constant 0 : index
    %109 = vector.load %arg7[%c0_26, %c0_27, %c0_28, %c0_29] : memref<8x1x1x256xf32, #tpu.memory_space<vmem>>, vector<8x1x1x256xf32>
    %110 = vector.shape_cast %109 : vector<8x1x1x256xf32> to vector<8x256xf32>
    %111 = vector.shape_cast %66 : vector<8x256xf32> to vector<8x1x1x256xf32>
    tpu.vector_store %arg7[%c0_26, %c0_27, %c0_28, %c0_29], %111 {strides = array<i32>} : memref<8x1x1x256xf32, #tpu.memory_space<vmem>>, vector<8x1x1x256xf32>,
    %c0_30 = arith.constant 0 : index
    %c0_31 = arith.constant 0 : index
    %c0_32 = arith.constant 0 : index
    %c0_33 = arith.constant 0 : index
    %112 = vector.load %arg8[%c0_30, %c0_31, %c0_32, %c0_33] : memref<8x1x1x256xf32, #tpu.memory_space<vmem>>, vector<8x1x1x256xf32>
    %113 = vector.shape_cast %112 : vector<8x1x1x256xf32> to vector<8x256xf32>
    %114 = vector.shape_cast %87 : vector<8x256xf32> to vector<8x1x1x256xf32>
    tpu.vector_store %arg8[%c0_30, %c0_31, %c0_32, %c0_33], %114 {strides = array<i32>} : memref<8x1x1x256xf32, #tpu.memory_space<vmem>>, vector<8x1x1x256xf32>,
    %c0_34 = arith.constant 0 : index
    %c0_35 = arith.constant 0 : index
    %c0_36 = arith.constant 0 : index
    %c0_37 = arith.constant 0 : index
    %115 = vector.load %arg9[%c0_34, %c0_35, %c0_36, %c0_37] : memref<8x1x1x256xf32, #tpu.memory_space<vmem>>, vector<8x1x1x256xf32>
    %116 = vector.shape_cast %115 : vector<8x1x1x256xf32> to vector<8x256xf32>
    %117 = vector.shape_cast %108 : vector<8x256xf32> to vector<8x1x1x256xf32>
    tpu.vector_store %arg9[%c0_34, %c0_35, %c0_36, %c0_37], %117 {strides = array<i32>} : memref<8x1x1x256xf32, #tpu.memory_space<vmem>>, vector<8x1x1x256xf32>,
    %cst_38 = arith.constant 0.000000e+00 : f32
    %118 = vector.broadcast %cst_38 : f32 to vector<1x1xf32>
    %c0_39 = arith.constant 0 : index
    %c0_40 = arith.constant 0 : index
    %c1 = arith.constant 1 : index
    %c0_41 = arith.constant 0 : index
    %119 = vector.load %arg6[%c0_39, %c0_40, %c1, %c0_41] : memref<8x1x8x256xf32, #tpu.memory_space<vmem>>, vector<8x1x1x256xf32>
    %120 = vector.shape_cast %119 : vector<8x1x1x256xf32> to vector<8x256xf32>
    %cst_42 = arith.constant 5.000000e-01 : f32
    %121 = vector.broadcast %cst_42 : f32 to vector<8x256xf32>
    %122 = arith.cmpf ogt, %120, %121 : vector<8x256xf32>
    %cst_43 = arith.constant 0.000000e+00 : f32
    %123 = vector.broadcast %cst_43 : f32 to vector<8x256xf32>
    %124 = arith.select %122, %87, %123 : vector<8x256xi1>, vector<8x256xf32>
    %125 = vector.shape_cast %124 : vector<8x256xf32> to vector<1x8x256xf32>
    %cst_44 = arith.constant dense<0.000000e+00> : vector<1xf32>
    %126 = vector.multi_reduction <add>, %125, %cst_44 [1, 2] : vector<1x8x256xf32> to vector<1xf32>
    %127 = vector.shape_cast %126 : vector<1xf32> to vector<1x1x1xf32>
    %128 = vector.extract %127[0, 0, 0] : f32 from vector<1x1x1xf32>
    %129 = vector.broadcast %128 : f32 to vector<1x1xf32>
    %c0_45 = arith.constant 0 : index
    %c0_46 = arith.constant 0 : index
    %c2 = arith.constant 2 : index
    %c0_47 = arith.constant 0 : index
    %130 = vector.load %arg6[%c0_45, %c0_46, %c2, %c0_47] : memref<8x1x8x256xf32, #tpu.memory_space<vmem>>, vector<8x1x1x256xf32>
    %131 = vector.shape_cast %130 : vector<8x1x1x256xf32> to vector<8x256xf32>
    %cst_48 = arith.constant 5.000000e-01 : f32
    %132 = vector.broadcast %cst_48 : f32 to vector<8x256xf32>
    %133 = arith.cmpf ogt, %131, %132 : vector<8x256xf32>
    %cst_49 = arith.constant 0.000000e+00 : f32
    %134 = vector.broadcast %cst_49 : f32 to vector<8x256xf32>
    %135 = arith.select %133, %66, %134 : vector<8x256xi1>, vector<8x256xf32>
    %136 = vector.shape_cast %135 : vector<8x256xf32> to vector<1x8x256xf32>
    %cst_50 = arith.constant dense<0.000000e+00> : vector<1xf32>
    %137 = vector.multi_reduction <add>, %136, %cst_50 [1, 2] : vector<1x8x256xf32> to vector<1xf32>
    %138 = vector.shape_cast %137 : vector<1xf32> to vector<1x1x1xf32>
    %139 = vector.extract %138[0, 0, 0] : f32 from vector<1x1x1xf32>
    %140 = vector.broadcast %139 : f32 to vector<1x1xf32>
    %c0_51 = arith.constant 0 : index
    %c0_52 = arith.constant 0 : index
    %c3 = arith.constant 3 : index
    %c0_53 = arith.constant 0 : index
    %141 = vector.load %arg6[%c0_51, %c0_52, %c3, %c0_53] : memref<8x1x8x256xf32, #tpu.memory_space<vmem>>, vector<8x1x1x256xf32>
    %142 = vector.shape_cast %141 : vector<8x1x1x256xf32> to vector<8x256xf32>
    %cst_54 = arith.constant 5.000000e-01 : f32
    %143 = vector.broadcast %cst_54 : f32 to vector<8x256xf32>
    %144 = arith.cmpf ogt, %142, %143 : vector<8x256xf32>
    %cst_55 = arith.constant 0.000000e+00 : f32
    %145 = vector.broadcast %cst_55 : f32 to vector<8x256xf32>
    %146 = arith.select %144, %108, %145 : vector<8x256xi1>, vector<8x256xf32>
    %147 = vector.shape_cast %146 : vector<8x256xf32> to vector<1x8x256xf32>
    %cst_56 = arith.constant dense<0.000000e+00> : vector<1xf32>
    %148 = vector.multi_reduction <add>, %147, %cst_56 [1, 2] : vector<1x8x256xf32> to vector<1xf32>
    %149 = vector.shape_cast %148 : vector<1xf32> to vector<1x1x1xf32>
    %150 = vector.extract %149[0, 0, 0] : f32 from vector<1x1x1xf32>
    %151 = vector.broadcast %150 : f32 to vector<1x1xf32>
    %c0_57 = arith.constant 0 : index
    %c0_58 = arith.constant 0 : index
    %c4 = arith.constant 4 : index
    %c0_59 = arith.constant 0 : index
    %152 = vector.load %arg6[%c0_57, %c0_58, %c4, %c0_59] : memref<8x1x8x256xf32, #tpu.memory_space<vmem>>, vector<8x1x1x256xf32>
    %153 = vector.shape_cast %152 : vector<8x1x1x256xf32> to vector<8x256xf32>
    %cst_60 = arith.constant 5.000000e-01 : f32
    %154 = vector.broadcast %cst_60 : f32 to vector<8x256xf32>
    %155 = arith.cmpf ogt, %153, %154 : vector<8x256xf32>
    %cst_61 = arith.constant 0.000000e+00 : f32
    %156 = vector.broadcast %cst_61 : f32 to vector<8x256xf32>
    %157 = arith.select %155, %108, %156 : vector<8x256xi1>, vector<8x256xf32>
    %158 = vector.shape_cast %157 : vector<8x256xf32> to vector<1x8x256xf32>
    %cst_62 = arith.constant dense<0.000000e+00> : vector<1xf32>
    %159 = vector.multi_reduction <add>, %158, %cst_62 [1, 2] : vector<1x8x256xf32> to vector<1xf32>
    %160 = vector.shape_cast %159 : vector<1xf32> to vector<1x1x1xf32>
    %161 = vector.extract %160[0, 0, 0] : f32 from vector<1x1x1xf32>
    %162 = vector.broadcast %161 : f32 to vector<1x1xf32>
    %c0_63 = arith.constant 0 : index
    %c0_64 = arith.constant 0 : index
    %c5 = arith.constant 5 : index
    %c0_65 = arith.constant 0 : index
    %163 = vector.load %arg6[%c0_63, %c0_64, %c5, %c0_65] : memref<8x1x8x256xf32, #tpu.memory_space<vmem>>, vector<8x1x1x256xf32>
    %164 = vector.shape_cast %163 : vector<8x1x1x256xf32> to vector<8x256xf32>
    %cst_66 = arith.constant 5.000000e-01 : f32
    %165 = vector.broadcast %cst_66 : f32 to vector<8x256xf32>
    %166 = arith.cmpf ogt, %164, %165 : vector<8x256xf32>
    %cst_67 = arith.constant 0.000000e+00 : f32
    %167 = vector.broadcast %cst_67 : f32 to vector<8x256xf32>
    %168 = arith.select %166, %108, %167 : vector<8x256xi1>, vector<8x256xf32>
    %169 = vector.shape_cast %168 : vector<8x256xf32> to vector<1x8x256xf32>
    %cst_68 = arith.constant dense<0.000000e+00> : vector<1xf32>
    %170 = vector.multi_reduction <add>, %169, %cst_68 [1, 2] : vector<1x8x256xf32> to vector<1xf32>
    %171 = vector.shape_cast %170 : vector<1xf32> to vector<1x1x1xf32>
    %172 = vector.extract %171[0, 0, 0] : f32 from vector<1x1x1xf32>
    %173 = vector.broadcast %172 : f32 to vector<1x1xf32>
    %c0_69 = arith.constant 0 : index
    %c0_70 = arith.constant 0 : index
    %c6 = arith.constant 6 : index
    %c0_71 = arith.constant 0 : index
    %174 = vector.load %arg6[%c0_69, %c0_70, %c6, %c0_71] : memref<8x1x8x256xf32, #tpu.memory_space<vmem>>, vector<8x1x1x256xf32>
    %175 = vector.shape_cast %174 : vector<8x1x1x256xf32> to vector<8x256xf32>
    %cst_72 = arith.constant 5.000000e-01 : f32
    %176 = vector.broadcast %cst_72 : f32 to vector<8x256xf32>
    %177 = arith.cmpf ogt, %175, %176 : vector<8x256xf32>
    %cst_73 = arith.constant 0.000000e+00 : f32
    %178 = vector.broadcast %cst_73 : f32 to vector<8x256xf32>
    %179 = arith.select %177, %66, %178 : vector<8x256xi1>, vector<8x256xf32>
    %180 = vector.shape_cast %179 : vector<8x256xf32> to vector<1x8x256xf32>
    %cst_74 = arith.constant dense<0.000000e+00> : vector<1xf32>
    %181 = vector.multi_reduction <add>, %180, %cst_74 [1, 2] : vector<1x8x256xf32> to vector<1xf32>
    %182 = vector.shape_cast %181 : vector<1xf32> to vector<1x1x1xf32>
    %183 = vector.extract %182[0, 0, 0] : f32 from vector<1x1x1xf32>
    %184 = vector.broadcast %183 : f32 to vector<1x1xf32>
    %c0_75 = arith.constant 0 : index
    %c0_76 = arith.constant 0 : index
    %c7 = arith.constant 7 : index
    %c0_77 = arith.constant 0 : index
    %185 = vector.load %arg6[%c0_75, %c0_76, %c7, %c0_77] : memref<8x1x8x256xf32, #tpu.memory_space<vmem>>, vector<8x1x1x256xf32>
    %186 = vector.shape_cast %185 : vector<8x1x1x256xf32> to vector<8x256xf32>
    %cst_78 = arith.constant 5.000000e-01 : f32
    %187 = vector.broadcast %cst_78 : f32 to vector<8x256xf32>
    %188 = arith.cmpf ogt, %186, %187 : vector<8x256xf32>
    %cst_79 = arith.constant 0.000000e+00 : f32
    %189 = vector.broadcast %cst_79 : f32 to vector<8x256xf32>
    %190 = arith.select %188, %87, %189 : vector<8x256xi1>, vector<8x256xf32>
    %191 = vector.shape_cast %190 : vector<8x256xf32> to vector<1x8x256xf32>
    %cst_80 = arith.constant dense<0.000000e+00> : vector<1xf32>
    %192 = vector.multi_reduction <add>, %191, %cst_80 [1, 2] : vector<1x8x256xf32> to vector<1xf32>
    %193 = vector.shape_cast %192 : vector<1xf32> to vector<1x1x1xf32>
    %194 = vector.extract %193[0, 0, 0] : f32 from vector<1x1x1xf32>
    %195 = vector.broadcast %194 : f32 to vector<1x1xf32>
    %196 = tpu.concatenate %129, %140, %151, %162, %173, %184, %195, %118 in 0 : vector<1x1xf32>, vector<1x1xf32>, vector<1x1xf32>, vector<1x1xf32>, vector<1x1xf32>, vector<1x1xf32>, vector<1x1xf32>, vector<1x1xf32> -> vector<8x1xf32>
    %197 = vector.broadcast %1 : f32 to vector<8x1xf32>
    %198 = arith.mulf %196, %197 : vector<8x1xf32>
    %c0_81 = arith.constant 0 : index
    %c0_82 = arith.constant 0 : index
    %c0_83 = arith.constant 0 : index
    %c0_84 = arith.constant 0 : index
    %199 = vector.load %arg10[%c0_81, %c0_82, %c0_83, %c0_84] : memref<1x1x8x1xf32, #tpu.memory_space<vmem>>, vector<1x1x8x1xf32>
    %200 = vector.shape_cast %199 : vector<1x1x8x1xf32> to vector<8x1xf32>
    %201 = vector.shape_cast %198 : vector<8x1xf32> to vector<1x1x8x1xf32>
    tpu.vector_store %arg10[%c0_81, %c0_82, %c0_83, %c0_84], %201 {strides = array<i32>} : memref<1x1x8x1xf32, #tpu.memory_space<vmem>>, vector<1x1x8x1xf32>,
    return
  }
  func.func @transform_0(%arg0: i32, %arg1: i32) -> i32 {
    %c0_i32 = arith.constant 0 : i32
    %c0_i32_0 = arith.constant 0 : i32
    return %c0_i32 : i32
  }
  func.func @transform_1(%arg0: i32, %arg1: i32) -> (i32, i32) {
    %c0_i32 = arith.constant 0 : i32
    %c0_i32_0 = arith.constant 0 : i32
    %c0_i32_1 = arith.constant 0 : i32
    return %c0_i32, %c0_i32_0 : i32, i32
  }
  func.func @transform_2(%arg0: i32, %arg1: i32) -> (i32, i32) {
    %c0_i32 = arith.constant 0 : i32
    %c0_i32_0 = arith.constant 0 : i32
    %c0_i32_1 = arith.constant 0 : i32
    return %c0_i32, %c0_i32_0 : i32, i32
  }
  func.func @transform_3(%arg0: i32, %arg1: i32) -> (i32, i32, i32, i32) {
    %c0_i32 = arith.constant 0 : i32
    %c0_i32_0 = arith.constant 0 : i32
    %c0_i32_1 = arith.constant 0 : i32
    return %arg0, %arg1, %c0_i32, %c0_i32_0 : i32, i32, i32, i32
  }
  func.func @transform_4(%arg0: i32, %arg1: i32) -> (i32, i32, i32, i32) {
    %c1_i32 = arith.constant 1 : i32
    %0 = arith.addi %arg1, %c1_i32 : i32
    %c0_i32 = arith.constant 0 : i32
    %c0_i32_0 = arith.constant 0 : i32
    %c0_i32_1 = arith.constant 0 : i32
    return %arg0, %0, %c0_i32, %c0_i32_0 : i32, i32, i32, i32
  }
  func.func @transform_5(%arg0: i32, %arg1: i32) -> (i32, i32, i32, i32) {
    %c0_i32 = arith.constant 0 : i32
    %c0_i32_0 = arith.constant 0 : i32
    %c0_i32_1 = arith.constant 0 : i32
    return %arg0, %arg1, %c0_i32, %c0_i32_0 : i32, i32, i32, i32
  }
  func.func @transform_6(%arg0: i32, %arg1: i32) -> (i32, i32, i32, i32) {
    %c0_i32 = arith.constant 0 : i32
    %c0_i32_0 = arith.constant 0 : i32
    %c0_i32_1 = arith.constant 0 : i32
    return %arg0, %arg1, %c0_i32, %c0_i32_0 : i32, i32, i32, i32
  }
  func.func @transform_7(%arg0: i32, %arg1: i32) -> (i32, i32, i32, i32) {
    %c0_i32 = arith.constant 0 : i32
    %c0_i32_0 = arith.constant 0 : i32
    %c0_i32_1 = arith.constant 0 : i32
    return %arg0, %arg1, %c0_i32, %c0_i32_0 : i32, i32, i32, i32
  }
  func.func @transform_8(%arg0: i32, %arg1: i32) -> (i32, i32, i32, i32) {
    %c0_i32 = arith.constant 0 : i32
    %c0_i32_0 = arith.constant 0 : i32
    %c0_i32_1 = arith.constant 0 : i32
    return %arg0, %arg1, %c0_i32, %c0_i32_0 : i32, i32, i32, i32
  }
}

</mosaic_0001>

<llo_original>
// kernel: tpu_custom_call.1
$region0: #{tpu_custom_call.1}
  #allocation0 [shape = 'u32[]', space=smem, size = 0x4, offset = 0x4, fixed_abs, tag = 'smem constant byte address 0x4 - core index']
  #allocation1 [shape = 'u32[144,128]{1,0:T(1,128)}', space=vmem, size = 0x12000, scoped, tag = 'internal scratch']
  %s0 = inlined_call_operand.hbm [shape: f32[8], index: 0, kind: input, shape index: {}]
  %s1 = inlined_call_operand.hbm [shape: f32[1,256], index: 1, kind: input, shape index: {}]
  %s2 = inlined_call_operand.hbm [shape: f32[1,256], index: 2, kind: input, shape index: {}]
  %s3 = inlined_call_operand.hbm [shape: f32[8,8,1,8], index: 3, kind: input, shape index: {}]
  %s4 = inlined_call_operand.hbm [shape: f32[8,9,8,256], index: 4, kind: input, shape index: {}]
  %s5 = inlined_call_operand.hbm [shape: f32[8,8,1,256], index: 5, kind: output, shape index: {0}]
  %s6 = inlined_call_operand.hbm [shape: f32[8,8,1,256], index: 6, kind: output, shape index: {1}]
  %s7 = inlined_call_operand.hbm [shape: f32[8,8,1,256], index: 7, kind: output, shape index: {2}]
  %s8 = inlined_call_operand.hbm [shape: f32[1,8,8,1], index: 8, kind: output, shape index: {3}]
  %9 = xla_tuple %s5, %s6, %s7, %s8
  %s10 = sld [smem:[#allocation0]]
  $region97: #{tpu_custom_call.1} parent=0
    _
  %s12 = ssub.s32 1, %s10
  %s13 = scalar_select 0, %s12, %s10
  $region1: #{tpu_custom_call.1} parent=0
    #allocation2 [shape = 'u8[512]{0}', space=smem, size = 0x200, scoped, tag = 'input window, operand 0, single buffered']
    #allocation3 [shape = 's32[2]{0}', space=sflag, size = 0x8, scoped, tag = 'scoped memory for tpu_custom_call.1']
    #allocation4 [shape = 's32[2]{0}', space=sflag, size = 0x8, scoped, tag = 'scoped memory for tpu_custom_call.1']
    #allocation5 [shape = 's32[2]{0}', space=sflag, size = 0x8, scoped, tag = 'scoped memory for tpu_custom_call.1']
    #allocation6 [shape = 'u8[1024]{0}', space=vmem, size = 0x400, scoped, tag = 'input window, operand 1, single buffered']
    #allocation7 [shape = 'u8[1024]{0}', space=vmem, size = 0x400, scoped, tag = 'input window, operand 2, single buffered']
    #allocation8 [shape = 's32[1]{0}', space=sflag, size = 0x4, scoped, tag = 'scoped memory for tpu_custom_call.1']
    #allocation9 [shape = 'u8[8192]{0}', space=vmem, size = 0x2000, scoped, tag = 'input window, operand 3']
    #allocation10 [shape = 'u8[131072]{0}', space=vmem, size = 0x20000, scoped, tag = 'input window, operand 4']
    #allocation11 [shape = 'u8[16384]{0}', space=vmem, size = 0x4000, scoped, tag = 'output window, operand 0']
    #allocation12 [shape = 'u8[16384]{0}', space=vmem, size = 0x4000, scoped, tag = 'output window, operand 1']
    #allocation13 [shape = 's32[2]{0}', space=sflag, size = 0x8, scoped, tag = 'scoped memory for tpu_custom_call.1']
    #allocation14 [shape = 'u8[16384]{0}', space=vmem, size = 0x4000, scoped, tag = 'output window, operand 2']
    #allocation15 [shape = 'u8[8192]{0}', space=vmem, size = 0x2000, scoped, tag = 'output window, operand 3']
    #allocation16 [shape = 's32[2]{0}', space=sflag, size = 0x8, scoped, tag = 'scoped memory for tpu_custom_call.1']
    %14 = vsyncpa [#allocation5], 0
    %15 = vsyncpa [#allocation3], 0
    %16 = vsyncpa [#allocation8], 0
    %17 = vsyncpa [#allocation4], 0
    %s18 = scalar_lea.sflag [#allocation4], 1
    %19 = vsyncpa %s18, 0
    %20 = vsyncpa [#allocation13], 0
    %s21 = scalar_lea.sflag [#allocation13], 1
    %22 = vsyncpa %s21, 0
    %23 = vsyncpa [#allocation16], 0
    %s24 = scalar_lea.sflag [#allocation16], 1
    %25 = vsyncpa %s24, 0
    loop: start=0, step=1, limit=10
    $region2: #{tpu_custom_call.1} parent=1 // loop_pre_header
      _
    $region3: #{tpu_custom_call.1} parent=1 // loop_header
      %s27 = sphi 0, %s31
      %p28 = scmp.ge.s32.totalorder %s27, 10
      %s34 = sphi 0, %s46
      %s35 = sphi 0, %s42
      %s36 = sphi 0, %s34
      %s37 = sphi 0, %s35
      %s38 = sphi 0, %s36
      %s39 = sphi 0, %s37
      %s47 = sphi 0, %s47
      %s49 = sphi 0, %s47
      %s50 = sphi 0, %s49
      %s64 = sphi 0, %s50
      %s68 = sphi 0, %s68
      %s70 = sphi 0, %s68
      %s71 = sphi 0, %s70
      %s85 = sphi 0, %s71
      %s89 = sphi 0, %s89
      %s91 = sphi 0, %s89
      %s92 = sphi 0, %s91
      %s106 = sphi 0, %s92
      %s114 = sphi 0, %s116
      %s117 = sphi 0, %s114
      %s118 = sphi 0, %s117
      %s134 = sphi 0, %s118
      %s144 = sphi 0, %s146
      %s147 = sphi 0, %s144
      %s148 = sphi 0, %s147
      %s164 = sphi 0, %s148
      %s172 = sphi 0, %s174
      %s175 = sphi 0, %s172
      %s176 = sphi 0, %s175
      %s192 = sphi 0, %s176
      %s200 = sphi 0, %s202
      %s203 = sphi 0, %s200
      %s204 = sphi 0, %s203
      %s220 = sphi 0, %s204
      %s228 = sphi 0, %s230
      %s231 = sphi 0, %s228
      %s232 = sphi 0, %s231
      %s248 = sphi 0, %s232
      %s256 = sphi 0, %s258
      %s259 = sphi 0, %s256
      %s260 = sphi 0, %s259
      %s276 = sphi 0, %s260
    $region4: #{tpu_custom_call.1} parent=1 // loop_header_branch
      %30 = sbr.rel (%p28) target = $region8
    $region5: #{tpu_custom_call.1} parent=1 // loop_body
      %s32 = ssub.s32 %s27, 1
      %s33 = ssub.s32 %s27, 2
      %s40 = sadd.s32 1, %s35
      %p41 = scmp.ge.s32.totalorder %s40, 8
      %s42 = scalar_select %p41, 0, %s40
      %s43 = sadd.s32 1, %s34
      %s44 = scalar_select %p41, %s43, %s34
      %p45 = scmp.ge.s32.totalorder %s44, 1
      %s46 = scalar_select %p45, 0, %s44
      %s48 = sadd.s32 %s47, 1
      %p51 = scmp.eq.s32.totalorder %s27, 7
      %p52 = scmp.ne.s32.totalorder %s47, %s49
      %p53 = scmp.eq.s32.totalorder %s27, 0
      %p54 = por %p52, %p53
      %p55 = scmp.ne.s32.totalorder %s47, %s49
      %p56 = scmp.eq.s32.totalorder %s32, 7
      %p57 = por %p55, %p56
      %p58 = scmp.ne.s32.totalorder %s49, %s50
      %p59 = scmp.eq.s32.totalorder %s32, 0
      %p60 = por %p58, %p59
      %p61 = scmp.ne.s32.totalorder %s49, %s50
      %p62 = scmp.eq.s32.totalorder %s33, 7
      %p63 = por %p61, %p62
      %p65 = scmp.ne.s32.totalorder %s50, %s64
      %p66 = scmp.eq.s32.totalorder %s33, 0
      %p67 = por %p65, %p66
      %s69 = sadd.s32 %s68, 1
      %p72 = scmp.eq.s32.totalorder %s27, 7
      %p73 = scmp.ne.s32.totalorder %s68, %s70
      %p74 = scmp.eq.s32.totalorder %s27, 0
      %p75 = por %p73, %p74
      %p76 = scmp.ne.s32.totalorder %s68, %s70
      %p77 = scmp.eq.s32.totalorder %s32, 7
      %p78 = por %p76, %p77
      %p79 = scmp.ne.s32.totalorder %s70, %s71
      %p80 = scmp.eq.s32.totalorder %s32, 0
      %p81 = por %p79, %p80
      %p82 = scmp.ne.s32.totalorder %s70, %s71
      %p83 = scmp.eq.s32.totalorder %s33, 7
      %p84 = por %p82, %p83
      %p86 = scmp.ne.s32.totalorder %s71, %s85
      %p87 = scmp.eq.s32.totalorder %s33, 0
      %p88 = por %p86, %p87
      %s90 = sadd.s32 %s89, 1
      %p93 = scmp.eq.s32.totalorder %s27, 7
      %p94 = scmp.ne.s32.totalorder %s89, %s91
      %p95 = scmp.eq.s32.totalorder %s27, 0
      %p96 = por %p94, %p95
      %p97 = scmp.ne.s32.totalorder %s89, %s91
      %p98 = scmp.eq.s32.totalorder %s32, 7
      %p99 = por %p97, %p98
      %p100 = scmp.ne.s32.totalorder %s91, %s92
      %p101 = scmp.eq.s32.totalorder %s32, 0
      %p102 = por %p100, %p101
      %p103 = scmp.ne.s32.totalorder %s91, %s92
      %p104 = scmp.eq.s32.totalorder %s33, 7
      %p105 = por %p103, %p104
      %p107 = scmp.ne.s32.totalorder %s92, %s106
      %p108 = scmp.eq.s32.totalorder %s33, 0
      %p109 = por %p107, %p108
      %s110 = ssub.s32 %s34, %s46
      %s111 = ssub.s32 %s35, %s42
      %s112 = sor.u32 %s110, %s111
      %p113 = scmp.eq.s32.totalorder %s112, 0
      %s115 = sadd.s32 %s114, 1
      %s116 = scalar_select %p113, %s114, %s115
      %p119 = pneg %p113
      %p120 = scmp.eq.s32.totalorder %s27, 7
      %p121 = por %p119, %p120
      %p122 = scmp.ne.s32.totalorder %s114, %s117
      %p123 = scmp.eq.s32.totalorder %s27, 0
      %p124 = por %p122, %p123
      %p125 = scmp.ne.s32.totalorder %s114, %s117
      %p126 = scmp.eq.s32.totalorder %s32, 7
      %p127 = por %p125, %p126
      %p128 = scmp.ne.s32.totalorder %s117, %s118
      %p129 = scmp.eq.s32.totalorder %s32, 0
      %p130 = por %p128, %p129
      %p131 = scmp.ne.s32.totalorder %s117, %s118
      %p132 = scmp.eq.s32.totalorder %s33, 7
      %p133 = por %p131, %p132
      %p135 = scmp.ne.s32.totalorder %s118, %s134
      %p136 = scmp.eq.s32.totalorder %s33, 0
      %p137 = por %p135, %p136
      %s138 = sadd.s32 %s35, 1
      %s139 = sadd.s32 %s42, 1
      %s140 = ssub.s32 %s34, %s46
      %s141 = ssub.s32 %s138, %s139
      %s142 = sor.u32 %s140, %s141
      %p143 = scmp.eq.s32.totalorder %s142, 0
      %s145 = sadd.s32 %s144, 1
      %s146 = scalar_select %p143, %s144, %s145
      %p149 = pneg %p143
      %p150 = scmp.eq.s32.totalorder %s27, 7
      %p151 = por %p149, %p150
      %p152 = scmp.ne.s32.totalorder %s144, %s147
      %p153 = scmp.eq.s32.totalorder %s27, 0
      %p154 = por %p152, %p153
      %p155 = scmp.ne.s32.totalorder %s144, %s147
      %p156 = scmp.eq.s32.totalorder %s32, 7
      %p157 = por %p155, %p156
      %p158 = scmp.ne.s32.totalorder %s147, %s148
      %p159 = scmp.eq.s32.totalorder %s32, 0
      %p160 = por %p158, %p159
      %p161 = scmp.ne.s32.totalorder %s147, %s148
      %p162 = scmp.eq.s32.totalorder %s33, 7
      %p163 = por %p161, %p162
      %p165 = scmp.ne.s32.totalorder %s148, %s164
      %p166 = scmp.eq.s32.totalorder %s33, 0
      %p167 = por %p165, %p166
      %s168 = ssub.s32 %s34, %s46
      %s169 = ssub.s32 %s35, %s42
      %s170 = sor.u32 %s168, %s169
      %p171 = scmp.eq.s32.totalorder %s170, 0
      %s173 = sadd.s32 %s172, 1
      %s174 = scalar_select %p171, %s172, %s173
      %p177 = pneg %p171
      %p178 = scmp.eq.s32.totalorder %s27, 7
      %p179 = por %p177, %p178
      %p180 = scmp.ne.s32.totalorder %s172, %s175
      %p181 = scmp.eq.s32.totalorder %s27, 0
      %p182 = por %p180, %p181
      %p183 = scmp.ne.s32.totalorder %s172, %s175
      %p184 = scmp.eq.s32.totalorder %s32, 7
      %p185 = por %p183, %p184
      %p186 = scmp.ne.s32.totalorder %s175, %s176
      %p187 = scmp.eq.s32.totalorder %s32, 0
      %p188 = por %p186, %p187
      %p189 = scmp.ne.s32.totalorder %s175, %s176
      %p190 = scmp.eq.s32.totalorder %s33, 7
      %p191 = por %p189, %p190
      %p193 = scmp.ne.s32.totalorder %s176, %s192
      %p194 = scmp.eq.s32.totalorder %s33, 0
      %p195 = por %p193, %p194
      %s196 = ssub.s32 %s34, %s46
      %s197 = ssub.s32 %s35, %s42
      %s198 = sor.u32 %s196, %s197
      %p199 = scmp.eq.s32.totalorder %s198, 0
      %s201 = sadd.s32 %s200, 1
      %s202 = scalar_select %p199, %s200, %s201
      %p205 = pneg %p199
      %p206 = scmp.eq.s32.totalorder %s27, 7
      %p207 = por %p205, %p206
      %p208 = scmp.ne.s32.totalorder %s200, %s203
      %p209 = scmp.eq.s32.totalorder %s27, 0
      %p210 = por %p208, %p209
      %p211 = scmp.ne.s32.totalorder %s200, %s203
      %p212 = scmp.eq.s32.totalorder %s32, 7
      %p213 = por %p211, %p212
      %p214 = scmp.ne.s32.totalorder %s203, %s204
      %p215 = scmp.eq.s32.totalorder %s32, 0
      %p216 = por %p214, %p215
      %p217 = scmp.ne.s32.totalorder %s203, %s204
      %p218 = scmp.eq.s32.totalorder %s33, 7
      %p219 = por %p217, %p218
      %p221 = scmp.ne.s32.totalorder %s204, %s220
      %p222 = scmp.eq.s32.totalorder %s33, 0
      %p223 = por %p221, %p222
      %s224 = ssub.s32 %s34, %s46
      %s225 = ssub.s32 %s35, %s42
      %s226 = sor.u32 %s224, %s225
      %p227 = scmp.eq.s32.totalorder %s226, 0
      %s229 = sadd.s32 %s228, 1
      %s230 = scalar_select %p227, %s228, %s229
      %p233 = pneg %p227
      %p234 = scmp.eq.s32.totalorder %s27, 7
      %p235 = por %p233, %p234
      %p236 = scmp.ne.s32.totalorder %s228, %s231
      %p237 = scmp.eq.s32.totalorder %s27, 0
      %p238 = por %p236, %p237
      %p239 = scmp.ne.s32.totalorder %s228, %s231
      %p240 = scmp.eq.s32.totalorder %s32, 7
      %p241 = por %p239, %p240
      %p242 = scmp.ne.s32.totalorder %s231, %s232
      %p243 = scmp.eq.s32.totalorder %s32, 0
      %p244 = por %p242, %p243
      %p245 = scmp.ne.s32.totalorder %s231, %s232
      %p246 = scmp.eq.s32.totalorder %s33, 7
      %p247 = por %p245, %p246
      %p249 = scmp.ne.s32.totalorder %s232, %s248
      %p250 = scmp.eq.s32.totalorder %s33, 0
      %p251 = por %p249, %p250
      %s252 = ssub.s32 %s34, %s46
      %s253 = ssub.s32 %s35, %s42
      %s254 = sor.u32 %s252, %s253
      %p255 = scmp.eq.s32.totalorder %s254, 0
      %s257 = sadd.s32 %s256, 1
      %s258 = scalar_select %p255, %s256, %s257
      %p261 = pneg %p255
      %p262 = scmp.eq.s32.totalorder %s27, 7
      %p263 = por %p261, %p262
      %p264 = scmp.ne.s32.totalorder %s256, %s259
      %p265 = scmp.eq.s32.totalorder %s27, 0
      %p266 = por %p264, %p265
      %p267 = scmp.ne.s32.totalorder %s256, %s259
      %p268 = scmp.eq.s32.totalorder %s32, 7
      %p269 = por %p267, %p268
      %p270 = scmp.ne.s32.totalorder %s259, %s260
      %p271 = scmp.eq.s32.totalorder %s32, 0
      %p272 = por %p270, %p271
      %p273 = scmp.ne.s32.totalorder %s259, %s260
      %p274 = scmp.eq.s32.totalorder %s33, 7
      %p275 = por %p273, %p274
      %p277 = scmp.ne.s32.totalorder %s260, %s276
      %p278 = scmp.eq.s32.totalorder %s33, 0
      %p279 = por %p277, %p278
      %p280 = scmp.le.s32.totalorder 1, %s27
      %p281 = scmp.lt.s32.totalorder %s27, 9
      %p282 = pnand %p280, %p281
      %p283 = pneg %p282
      // Predicated region
      $region9: #{tpu_custom_call.1} parent=5 // pred_check
        _
      $region10: #{tpu_custom_call.1} parent=5 // pred_check_branch
        %285 = sbr.rel (%p282) target = $region12
      $region11: #{tpu_custom_call.1} parent=5 // pred_region
        %s286 = ssub.s32 %s27, 1
        // Predicated region
        $region13: #{tpu_custom_call.1} parent=11 // pred_check
          %p287 = pneg %p60
        $region14: #{tpu_custom_call.1} parent=11 // pred_check_branch
          %289 = sbr.rel (%p287) target = $region16
        $region15: #{tpu_custom_call.1} parent=11 // pred_region
          %s291 = ssub.s32 16, 16
          %292 = vsyncadd [#allocation5], %s291
          %295 = dma.hbm_to_smem %s0, 16, [#allocation2], [#allocation5]
        $region16: #{tpu_custom_call.1} parent=11 // pred_fallthru
          _
        // Predicated region
        $region17: #{tpu_custom_call.1} parent=11 // pred_check
          %p296 = pneg %p81
        $region18: #{tpu_custom_call.1} parent=11 // pred_check_branch
          %298 = sbr.rel (%p296) target = $region20
        $region19: #{tpu_custom_call.1} parent=11 // pred_region
          %s300 = ssub.s32 32, 32
          %301 = vsyncadd [#allocation3], %s300
          %s303 = sshll.u32 [#allocation6], 4
          %s304 = int_to_ptr.vmem [resolvable:$true] %s303
          %306 = dma.hbm_to_vmem [thread:$0]  %s1, 32, %s304, [#allocation3]
        $region20: #{tpu_custom_call.1} parent=11 // pred_fallthru
          _
        // Predicated region
        $region21: #{tpu_custom_call.1} parent=11 // pred_check
          %p307 = pneg %p102
        $region22: #{tpu_custom_call.1} parent=11 // pred_check_branch
          %309 = sbr.rel (%p307) target = $region24
        $region23: #{tpu_custom_call.1} parent=11 // pred_region
          %s311 = ssub.s32 32, 32
          %312 = vsyncadd [#allocation8], %s311
          %s314 = sshll.u32 [#allocation7], 4
          %s315 = int_to_ptr.vmem [resolvable:$true] %s314
          %317 = dma.hbm_to_vmem [thread:$0]  %s2, 32, %s315, [#allocation8]
        $region24: #{tpu_custom_call.1} parent=11 // pred_fallthru
          _
      $region12: #{tpu_custom_call.1} parent=5 // pred_fallthru
        _
      %p318 = scmp.lt.s32.totalorder %s27, 8
      // Predicated region
      $region25: #{tpu_custom_call.1} parent=5 // pred_check
        %p319 = pneg %p318
      $region26: #{tpu_custom_call.1} parent=5 // pred_check_branch
        %321 = sbr.rel (%p319) target = $region28
      $region27: #{tpu_custom_call.1} parent=5 // pred_region
        // Predicated region
        $region29: #{tpu_custom_call.1} parent=27 // pred_check
          %p322 = pneg %p124
        $region30: #{tpu_custom_call.1} parent=27 // pred_check_branch
          %324 = sbr.rel (%p322) target = $region32
        $region31: #{tpu_custom_call.1} parent=27 // pred_region
          %s325 = sand.u32 %s27, 1
          %s326 = scalar_lea.sflag [#allocation3], %s325
          %s327 = sand.u32 %s114, 1
          %s328 = smul.addr %s327, 8
          %s329 = scalar_lea.vmem [#allocation9], %s328
          %s330 = smul.u32 8, %s34
          %s332 = ssub.s32 128, 128
          %333 = vsyncadd %s326, %s332
          %s334 = smul.addr %s330, 8
          %s335 = sadd.s32 %s35, %s334
          %s336 = smul.addr %s335, 16
          %s337 = scalar_lea.hbm %s3, %s336
          %s338 = sshll.u32 %s329, 4
          %s339 = int_to_ptr.vmem [resolvable:$true] %s338
          %344 = dma.hbm_to_vmem [thread:$0]  %s337, 128, %s339, %s326, 128, 16, 1
        $region32: #{tpu_custom_call.1} parent=27 // pred_fallthru
          _
        // Predicated region
        $region33: #{tpu_custom_call.1} parent=27 // pred_check
          %p345 = pneg %p154
        $region34: #{tpu_custom_call.1} parent=27 // pred_check_branch
          %347 = sbr.rel (%p345) target = $region36
        $region35: #{tpu_custom_call.1} parent=27 // pred_region
          %s348 = sand.u32 %s27, 1
          %s349 = scalar_lea.sflag [#allocation3], %s348
          %s350 = sand.u32 %s144, 1
          %s351 = smul.addr %s350, 128
          %s352 = scalar_lea.vmem [#allocation10], %s351
          %s353 = sadd.s32 %s35, 1
          %s354 = smul.u32 8, %s34
          %s356 = ssub.s32 2048, 2048
          %357 = vsyncadd %s349, %s356
          %s358 = smul.addr %s353, 2
          %s359 = smul.addr %s354, 18
          %s360 = sadd.s32 %s358, %s359
          %s361 = smul.addr %s360, 128
          %s362 = scalar_lea.hbm %s4, %s361
          %s363 = sshll.u32 %s352, 4
          %s364 = int_to_ptr.vmem [resolvable:$true] %s363
          %369 = dma.hbm_to_vmem [thread:$0]  %s362, 2048, %s364, %s349, 2304, 256, 16
        $region36: #{tpu_custom_call.1} parent=27 // pred_fallthru
          _
      $region28: #{tpu_custom_call.1} parent=5 // pred_fallthru
        _
      %p370 = scmp.le.s32.totalorder 1, %s27
      %p371 = scmp.lt.s32.totalorder %s27, 9
      %p372 = pnand %p370, %p371
      %p373 = pneg %p372
      // Predicated region
      $region37: #{tpu_custom_call.1} parent=5 // pred_check
        _
      $region38: #{tpu_custom_call.1} parent=5 // pred_check_branch
        %375 = sbr.rel (%p372) target = $region40
      $region39: #{tpu_custom_call.1} parent=5 // pred_region
        %s376 = ssub.s32 %s27, 1
        // Predicated region
        $region41: #{tpu_custom_call.1} parent=39 // pred_check
          %p377 = pneg %p60
        $region42: #{tpu_custom_call.1} parent=39 // pred_check_branch
          %379 = sbr.rel (%p377) target = $region44
        $region43: #{tpu_custom_call.1} parent=39 // pred_region
          %380 = dma.done [#allocation5], 16
        $region44: #{tpu_custom_call.1} parent=39 // pred_fallthru
          _
        // Predicated region
        $region45: #{tpu_custom_call.1} parent=39 // pred_check
          %p381 = pneg %p81
        $region46: #{tpu_custom_call.1} parent=39 // pred_check_branch
          %383 = sbr.rel (%p381) target = $region48
        $region47: #{tpu_custom_call.1} parent=39 // pred_region
          %384 = dma.done [#allocation3], 32
        $region48: #{tpu_custom_call.1} parent=39 // pred_fallthru
          _
        // Predicated region
        $region49: #{tpu_custom_call.1} parent=39 // pred_check
          %p385 = pneg %p102
        $region50: #{tpu_custom_call.1} parent=39 // pred_check_branch
          %387 = sbr.rel (%p385) target = $region52
        $region51: #{tpu_custom_call.1} parent=39 // pred_region
          %388 = dma.done [#allocation8], 32
        $region52: #{tpu_custom_call.1} parent=39 // pred_fallthru
          _
        %s389 = sand.u32 %s32, 1
        %s390 = scalar_lea.sflag [#allocation3], %s389
        %s391 = sand.u32 %s117, 1
        %s392 = smul.addr %s391, 8
        %s393 = scalar_lea.vmem [#allocation9], %s392
        // Predicated region
        $region53: #{tpu_custom_call.1} parent=39 // pred_check
          %p394 = pneg %p130
        $region54: #{tpu_custom_call.1} parent=39 // pred_check_branch
          %396 = sbr.rel (%p394) target = $region56
        $region55: #{tpu_custom_call.1} parent=39 // pred_region
          %397 = dma.done %s390, 128
        $region56: #{tpu_custom_call.1} parent=39 // pred_fallthru
          _
        %s398 = sand.u32 %s32, 1
        %s399 = scalar_lea.sflag [#allocation3], %s398
        %s400 = sand.u32 %s147, 1
        %s401 = smul.addr %s400, 128
        %s402 = scalar_lea.vmem [#allocation10], %s401
        // Predicated region
        $region57: #{tpu_custom_call.1} parent=39 // pred_check
          %p403 = pneg %p160
        $region58: #{tpu_custom_call.1} parent=39 // pred_check_branch
          %405 = sbr.rel (%p403) target = $region60
        $region59: #{tpu_custom_call.1} parent=39 // pred_region
          %406 = dma.done %s399, 2048
        $region60: #{tpu_custom_call.1} parent=39 // pred_fallthru
          _
        %407 = sfence
        %p408 = pneg %p60
        %p409 = pneg %p57
        %p410 = pneg %p81
        %p411 = pneg %p78
        %p412 = pneg %p102
        %p413 = pneg %p99
        %s414 = sand.u32 %s32, 1
        %s415 = scalar_lea.sflag [#allocation3], %s414
        %s416 = sand.u32 %s117, 1
        %s417 = smul.addr %s416, 8
        %s418 = scalar_lea.vmem [#allocation9], %s417
        %p419 = pneg %p130
        %p420 = pneg %p127
        %s421 = sand.u32 %s32, 1
        %s422 = scalar_lea.sflag [#allocation3], %s421
        %s423 = sand.u32 %s147, 1
        %s424 = smul.addr %s423, 128
        %s425 = scalar_lea.vmem [#allocation10], %s424
        %p426 = pneg %p160
        %p427 = pneg %p157
        %p428 = pneg %p188
        %p429 = pneg %p185
        %s430 = sand.u32 %s175, 1
        %s431 = scalar_lea.sflag [#allocation4], %s430
        %s432 = sand.u32 %s175, 1
        %s433 = smul.addr %s432, 16
        %s434 = scalar_lea.vmem [#allocation11], %s433
        %p435 = pneg %p216
        %p436 = pneg %p213
        %s437 = sand.u32 %s32, 1
        %s438 = scalar_lea.sflag [#allocation13], %s437
        %s439 = sand.u32 %s203, 1
        %s440 = smul.addr %s439, 16
        %s441 = scalar_lea.vmem [#allocation12], %s440
        %p442 = pneg %p244
        %p443 = pneg %p241
        %s444 = sand.u32 %s32, 1
        %s445 = scalar_lea.sflag [#allocation13], %s444
        %s446 = sand.u32 %s231, 1
        %s447 = smul.addr %s446, 16
        %s448 = scalar_lea.vmem [#allocation14], %s447
        %p449 = pneg %p272
        %p450 = pneg %p269
        %s451 = sand.u32 %s259, 1
        %s452 = scalar_lea.sflag [#allocation16], %s451
        %s453 = sand.u32 %s259, 1
        %s454 = smul.addr %s453, 8
        %s455 = scalar_lea.vmem [#allocation15], %s454
        %s456 = smul.u32 8, %s36
        %s457 = sadd.s32 %s37, 1
        %s458 = smul.u32 8, %s36
        %s459 = smul.u32 8, %s36
        %s460 = smul.u32 8, %s36
        %s461 = smul.u32 8, %s36
        %s462 = sld [smem:[#allocation2 + %s37]]
        %v463 = vld [vmem:[%s393] sm:$0x1]
        %v464 = vld [vmem:[%s393 + $0x1] sm:$0x1]
        %v465 = vld [vmem:[%s393 + $0x2] sm:$0x1]
        %v466 = vld [vmem:[%s393 + $0x3] sm:$0x1]
        %v467 = vld [vmem:[%s393 + $0x4] sm:$0x1]
        %v468 = vld [vmem:[%s393 + $0x5] sm:$0x1]
        %v469 = vld [vmem:[%s393 + $0x6] sm:$0x1]
        %v470 = vld [vmem:[%s393 + $0x7] sm:$0x1]
        %v471 = vld [vmem:[#allocation6] sm:$0x3]
        %v472 = vld [vmem:[#allocation7] sm:$0x3]
        %v474 = vlaneseq
        %v475 = vshrl.u32 %v474, 7
        %v476 = vsub.s32 0, %v475
        %v477 = vrot.slane %v471, %v476
        %v478 = vlaneseq
        %v479 = vshrl.u32 %v478, 7
        %v480 = vsub.s32 1, %v479
        %v481 = vrot.slane %v471, %v480
        %485 = vset.pattern.permute.xlu0 0
        %486 = vperm.xlu0 %485, %v463
        %v487 = vpop.permute.xlu0 %486
        %v489 = vlaneseq
        %v490 = vshrl.u32 %v489, 7
        %v491 = vsub.s32 0, %v490
        %v492 = vrot.slane %v487, %v491
        %494 = vset.pattern.permute.xlu0 0
        %495 = vperm.xlu0 %494, %v464
        %v496 = vpop.permute.xlu0 %495
        %v498 = vlaneseq
        %v499 = vshrl.u32 %v498, 7
        %v500 = vsub.s32 0, %v499
        %v501 = vrot.slane %v496, %v500
        %503 = vset.pattern.permute.xlu0 0
        %504 = vperm.xlu0 %503, %v465
        %v505 = vpop.permute.xlu0 %504
        %v507 = vlaneseq
        %v508 = vshrl.u32 %v507, 7
        %v509 = vsub.s32 0, %v508
        %v510 = vrot.slane %v505, %v509
        %512 = vset.pattern.permute.xlu0 0
        %513 = vperm.xlu0 %512, %v466
        %v514 = vpop.permute.xlu0 %513
        %v516 = vlaneseq
        %v517 = vshrl.u32 %v516, 7
        %v518 = vsub.s32 0, %v517
        %v519 = vrot.slane %v514, %v518
        %521 = vset.pattern.permute.xlu0 0
        %522 = vperm.xlu0 %521, %v467
        %v523 = vpop.permute.xlu0 %522
        %v525 = vlaneseq
        %v526 = vshrl.u32 %v525, 7
        %v527 = vsub.s32 0, %v526
        %v528 = vrot.slane %v523, %v527
        %530 = vset.pattern.permute.xlu0 0
        %531 = vperm.xlu0 %530, %v468
        %v532 = vpop.permute.xlu0 %531
        %v534 = vlaneseq
        %v535 = vshrl.u32 %v534, 7
        %v536 = vsub.s32 0, %v535
        %v537 = vrot.slane %v532, %v536
        %539 = vset.pattern.permute.xlu0 0
        %540 = vperm.xlu0 %539, %v469
        %v541 = vpop.permute.xlu0 %540
        %v543 = vlaneseq
        %v544 = vshrl.u32 %v543, 7
        %v545 = vsub.s32 0, %v544
        %v546 = vrot.slane %v541, %v545
        %548 = vset.pattern.permute.xlu0 0
        %549 = vperm.xlu0 %548, %v470
        %v550 = vpop.permute.xlu0 %549
        %v552 = vlaneseq
        %v553 = vshrl.u32 %v552, 7
        %v554 = vsub.s32 0, %v553
        %v555 = vrot.slane %v550, %v554
        %v564 = vcombine.low %v492, %v501
        %v565 = vcombine.low %v510, %v519
        %v566 = vcombine.low %v528, %v537
        %v567 = vcombine.low %v546, %v555
        %v569 = vunpack.c.l.s4 1966171168
        %v570 = vunpack.c.0.s8 %v569
        %v571 = vlaneseq
        %v572 = vshrl.u32 %v571, 7
        %v573 = vsub.s32 %v570, %v572
        %v574 = vrot.slane %v564, %v573
        %v576 = vunpack.c.l.s4 1966171168
        %v577 = vunpack.c.0.s8 %v576
        %v578 = vlaneseq
        %v579 = vshrl.u32 %v578, 7
        %v580 = vsub.s32 %v577, %v579
        %v581 = vrot.slane %v565, %v580
        %v583 = vunpack.c.l.s4 1966171168
        %v584 = vunpack.c.0.s8 %v583
        %v585 = vlaneseq
        %v586 = vshrl.u32 %v585, 7
        %v587 = vsub.s32 %v584, %v586
        %v588 = vrot.slane %v566, %v587
        %v590 = vunpack.c.l.s4 1966171168
        %v591 = vunpack.c.0.s8 %v590
        %v592 = vlaneseq
        %v593 = vshrl.u32 %v592, 7
        %v594 = vsub.s32 %v591, %v593
        %v595 = vrot.slane %v567, %v594
        %v596 = vcombine.low %v574, %v581
        %v597 = vcombine.high %v574, %v581
        %v598 = vcombine.low %v588, %v595
        %v599 = vcombine.high %v588, %v595
        %v601 = vunpack.c.l.s4 1966171168
        %v602 = vunpack.c.0.s8 %v601
        %v603 = vlaneseq
        %v604 = vshrl.u32 %v603, 7
        %v605 = vsub.s32 %v602, %v604
        %v606 = vrot.slane %v596, %v605
        %v608 = vunpack.c.l.s4 1966171168
        %v609 = vunpack.c.0.s8 %v608
        %v610 = vlaneseq
        %v611 = vshrl.u32 %v610, 7
        %v612 = vsub.s32 %v609, %v611
        %v613 = vrot.slane %v597, %v612
        %v615 = vunpack.c.l.s4 1966171168
        %v616 = vunpack.c.0.s8 %v615
        %v617 = vlaneseq
        %v618 = vshrl.u32 %v617, 7
        %v619 = vsub.s32 %v616, %v618
        %v620 = vrot.slane %v598, %v619
        %v622 = vunpack.c.l.s4 1966171168
        %v623 = vunpack.c.0.s8 %v622
        %v624 = vlaneseq
        %v625 = vshrl.u32 %v624, 7
        %v626 = vsub.s32 %v623, %v625
        %v627 = vrot.slane %v599, %v626
        %v628 = vcombine.low %v606, %v620
        %v629 = vcombine.low %v613, %v627
        %v632 = vsub.f32 %v477, %v628
        %v633 = vsub.f32 %v481, %v629
        %v635 = vlaneseq
        %v636 = vshrl.u32 %v635, 7
        %v637 = vsub.s32 0, %v636
        %v638 = vrot.slane %v472, %v637
        %v639 = vlaneseq
        %v640 = vshrl.u32 %v639, 7
        %v641 = vsub.s32 1, %v640
        %v642 = vrot.slane %v472, %v641
        %645 = vset.pattern.permute.xlu0 1
        %646 = vperm.xlu0 %645, %v463
        %v647 = vpop.permute.xlu0 %646
        %v649 = vlaneseq
        %v650 = vshrl.u32 %v649, 7
        %v651 = vsub.s32 0, %v650
        %v652 = vrot.slane %v647, %v651
        %653 = vset.pattern.permute.xlu0 1
        %654 = vperm.xlu0 %653, %v464
        %v655 = vpop.permute.xlu0 %654
        %v657 = vlaneseq
        %v658 = vshrl.u32 %v657, 7
        %v659 = vsub.s32 0, %v658
        %v660 = vrot.slane %v655, %v659
        %661 = vset.pattern.permute.xlu0 1
        %662 = vperm.xlu0 %661, %v465
        %v663 = vpop.permute.xlu0 %662
        %v665 = vlaneseq
        %v666 = vshrl.u32 %v665, 7
        %v667 = vsub.s32 0, %v666
        %v668 = vrot.slane %v663, %v667
        %669 = vset.pattern.permute.xlu0 1
        %670 = vperm.xlu0 %669, %v466
        %v671 = vpop.permute.xlu0 %670
        %v673 = vlaneseq
        %v674 = vshrl.u32 %v673, 7
        %v675 = vsub.s32 0, %v674
        %v676 = vrot.slane %v671, %v675
        %677 = vset.pattern.permute.xlu0 1
        %678 = vperm.xlu0 %677, %v467
        %v679 = vpop.permute.xlu0 %678
        %v681 = vlaneseq
        %v682 = vshrl.u32 %v681, 7
        %v683 = vsub.s32 0, %v682
        %v684 = vrot.slane %v679, %v683
        %685 = vset.pattern.permute.xlu0 1
        %686 = vperm.xlu0 %685, %v468
        %v687 = vpop.permute.xlu0 %686
        %v689 = vlaneseq
        %v690 = vshrl.u32 %v689, 7
        %v691 = vsub.s32 0, %v690
        %v692 = vrot.slane %v687, %v691
        %693 = vset.pattern.permute.xlu0 1
        %694 = vperm.xlu0 %693, %v469
        %v695 = vpop.permute.xlu0 %694
        %v697 = vlaneseq
        %v698 = vshrl.u32 %v697, 7
        %v699 = vsub.s32 0, %v698
        %v700 = vrot.slane %v695, %v699
        %701 = vset.pattern.permute.xlu0 1
        %702 = vperm.xlu0 %701, %v470
        %v703 = vpop.permute.xlu0 %702
        %v705 = vlaneseq
        %v706 = vshrl.u32 %v705, 7
        %v707 = vsub.s32 0, %v706
        %v708 = vrot.slane %v703, %v707
        %v717 = vcombine.low %v652, %v660
        %v718 = vcombine.low %v668, %v676
        %v719 = vcombine.low %v684, %v692
        %v720 = vcombine.low %v700, %v708
        %v722 = vunpack.c.l.s4 1966171168
        %v723 = vunpack.c.0.s8 %v722
        %v724 = vlaneseq
        %v725 = vshrl.u32 %v724, 7
        %v726 = vsub.s32 %v723, %v725
        %v727 = vrot.slane %v717, %v726
        %v729 = vunpack.c.l.s4 1966171168
        %v730 = vunpack.c.0.s8 %v729
        %v731 = vlaneseq
        %v732 = vshrl.u32 %v731, 7
        %v733 = vsub.s32 %v730, %v732
        %v734 = vrot.slane %v718, %v733
        %v736 = vunpack.c.l.s4 1966171168
        %v737 = vunpack.c.0.s8 %v736
        %v738 = vlaneseq
        %v739 = vshrl.u32 %v738, 7
        %v740 = vsub.s32 %v737, %v739
        %v741 = vrot.slane %v719, %v740
        %v743 = vunpack.c.l.s4 1966171168
        %v744 = vunpack.c.0.s8 %v743
        %v745 = vlaneseq
        %v746 = vshrl.u32 %v745, 7
        %v747 = vsub.s32 %v744, %v746
        %v748 = vrot.slane %v720, %v747
        %v749 = vcombine.low %v727, %v734
        %v750 = vcombine.high %v727, %v734
        %v751 = vcombine.low %v741, %v748
        %v752 = vcombine.high %v741, %v748
        %v754 = vunpack.c.l.s4 1966171168
        %v755 = vunpack.c.0.s8 %v754
        %v756 = vlaneseq
        %v757 = vshrl.u32 %v756, 7
        %v758 = vsub.s32 %v755, %v757
        %v759 = vrot.slane %v749, %v758
        %v761 = vunpack.c.l.s4 1966171168
        %v762 = vunpack.c.0.s8 %v761
        %v763 = vlaneseq
        %v764 = vshrl.u32 %v763, 7
        %v765 = vsub.s32 %v762, %v764
        %v766 = vrot.slane %v750, %v765
        %v768 = vunpack.c.l.s4 1966171168
        %v769 = vunpack.c.0.s8 %v768
        %v770 = vlaneseq
        %v771 = vshrl.u32 %v770, 7
        %v772 = vsub.s32 %v769, %v771
        %v773 = vrot.slane %v751, %v772
        %v775 = vunpack.c.l.s4 1966171168
        %v776 = vunpack.c.0.s8 %v775
        %v777 = vlaneseq
        %v778 = vshrl.u32 %v777, 7
        %v779 = vsub.s32 %v776, %v778
        %v780 = vrot.slane %v752, %v779
        %v781 = vcombine.low %v759, %v773
        %v782 = vcombine.low %v766, %v780
        %v785 = vsub.f32 %v638, %v781
        %v786 = vsub.f32 %v642, %v782
        %787 = vset.pattern.permute.xlu0 2
        %788 = vperm.xlu0 %787, %v463
        %v789 = vpop.permute.xlu0 %788
        %v791 = vlaneseq
        %v792 = vshrl.u32 %v791, 7
        %v793 = vsub.s32 0, %v792
        %v794 = vrot.slane %v789, %v793
        %795 = vset.pattern.permute.xlu0 2
        %796 = vperm.xlu0 %795, %v464
        %v797 = vpop.permute.xlu0 %796
        %v799 = vlaneseq
        %v800 = vshrl.u32 %v799, 7
        %v801 = vsub.s32 0, %v800
        %v802 = vrot.slane %v797, %v801
        %803 = vset.pattern.permute.xlu0 2
        %804 = vperm.xlu0 %803, %v465
        %v805 = vpop.permute.xlu0 %804
        %v807 = vlaneseq
        %v808 = vshrl.u32 %v807, 7
        %v809 = vsub.s32 0, %v808
        %v810 = vrot.slane %v805, %v809
        %811 = vset.pattern.permute.xlu0 2
        %812 = vperm.xlu0 %811, %v466
        %v813 = vpop.permute.xlu0 %812
        %v815 = vlaneseq
        %v816 = vshrl.u32 %v815, 7
        %v817 = vsub.s32 0, %v816
        %v818 = vrot.slane %v813, %v817
        %819 = vset.pattern.permute.xlu0 2
        %820 = vperm.xlu0 %819, %v467
        %v821 = vpop.permute.xlu0 %820
        %v823 = vlaneseq
        %v824 = vshrl.u32 %v823, 7
        %v825 = vsub.s32 0, %v824
        %v826 = vrot.slane %v821, %v825
        %827 = vset.pattern.permute.xlu0 2
        %828 = vperm.xlu0 %827, %v468
        %v829 = vpop.permute.xlu0 %828
        %v831 = vlaneseq
        %v832 = vshrl.u32 %v831, 7
        %v833 = vsub.s32 0, %v832
        %v834 = vrot.slane %v829, %v833
        %835 = vset.pattern.permute.xlu0 2
        %836 = vperm.xlu0 %835, %v469
        %v837 = vpop.permute.xlu0 %836
        %v839 = vlaneseq
        %v840 = vshrl.u32 %v839, 7
        %v841 = vsub.s32 0, %v840
        %v842 = vrot.slane %v837, %v841
        %843 = vset.pattern.permute.xlu0 2
        %844 = vperm.xlu0 %843, %v470
        %v845 = vpop.permute.xlu0 %844
        %v847 = vlaneseq
        %v848 = vshrl.u32 %v847, 7
        %v849 = vsub.s32 0, %v848
        %v850 = vrot.slane %v845, %v849
        %v853 = vcombine.low %v632, %v633
        %v854 = vcombine.high %v632, %v633
        %v856 = vunpack.c.l.s4 1966171168
        %v857 = vunpack.c.0.s8 %v856
        %v858 = vlaneseq
        %v859 = vshrl.u32 %v858, 7
        %v860 = vsub.s32 %v857, %v859
        %v861 = vrot.slane %v853, %v860
        %v863 = vunpack.c.l.s4 1966171168
        %v864 = vunpack.c.0.s8 %v863
        %v865 = vlaneseq
        %v866 = vshrl.u32 %v865, 7
        %v867 = vsub.s32 %v864, %v866
        %v868 = vrot.slane %v854, %v867
        %v869 = vcombine.high %v861, %v861
        %v870 = vcombine.high %v868, %v868
        %v872 = vunpack.c.l.s4 1966171168
        %v873 = vunpack.c.0.s8 %v872
        %v874 = vlaneseq
        %v875 = vshrl.u32 %v874, 7
        %v876 = vsub.s32 %v873, %v875
        %v877 = vrot.slane %v861, %v876
        %v879 = vunpack.c.l.s4 1966171168
        %v880 = vunpack.c.0.s8 %v879
        %v881 = vlaneseq
        %v882 = vshrl.u32 %v881, 7
        %v883 = vsub.s32 %v880, %v882
        %v884 = vrot.slane %v868, %v883
        %v886 = vunpack.c.l.s4 1966171168
        %v887 = vunpack.c.0.s8 %v886
        %v888 = vlaneseq
        %v889 = vshrl.u32 %v888, 7
        %v890 = vsub.s32 %v887, %v889
        %v891 = vrot.slane %v869, %v890
        %v893 = vunpack.c.l.s4 1966171168
        %v894 = vunpack.c.0.s8 %v893
        %v895 = vlaneseq
        %v896 = vshrl.u32 %v895, 7
        %v897 = vsub.s32 %v894, %v896
        %v898 = vrot.slane %v870, %v897
        %v899 = vcombine.high %v877, %v877
        %v900 = vcombine.high %v884, %v884
        %v901 = vcombine.high %v891, %v891
        %v902 = vcombine.high %v898, %v898
        %v911 = vmul.f32 %v794, %v877
        %v912 = vmul.f32 %v802, %v891
        %v913 = vmul.f32 %v810, %v899
        %v914 = vmul.f32 %v818, %v901
        %v915 = vmul.f32 %v826, %v884
        %v916 = vmul.f32 %v834, %v898
        %v917 = vmul.f32 %v842, %v900
        %v918 = vmul.f32 %v850, %v902
        %919 = vset.pattern.permute.xlu0 3
        %920 = vperm.xlu0 %919, %v463
        %v921 = vpop.permute.xlu0 %920
        %v923 = vlaneseq
        %v924 = vshrl.u32 %v923, 7
        %v925 = vsub.s32 0, %v924
        %v926 = vrot.slane %v921, %v925
        %927 = vset.pattern.permute.xlu0 3
        %928 = vperm.xlu0 %927, %v464
        %v929 = vpop.permute.xlu0 %928
        %v931 = vlaneseq
        %v932 = vshrl.u32 %v931, 7
        %v933 = vsub.s32 0, %v932
        %v934 = vrot.slane %v929, %v933
        %935 = vset.pattern.permute.xlu0 3
        %936 = vperm.xlu0 %935, %v465
        %v937 = vpop.permute.xlu0 %936
        %v939 = vlaneseq
        %v940 = vshrl.u32 %v939, 7
        %v941 = vsub.s32 0, %v940
        %v942 = vrot.slane %v937, %v941
        %943 = vset.pattern.permute.xlu0 3
        %944 = vperm.xlu0 %943, %v466
        %v945 = vpop.permute.xlu0 %944
        %v947 = vlaneseq
        %v948 = vshrl.u32 %v947, 7
        %v949 = vsub.s32 0, %v948
        %v950 = vrot.slane %v945, %v949
        %951 = vset.pattern.permute.xlu0 3
        %952 = vperm.xlu0 %951, %v467
        %v953 = vpop.permute.xlu0 %952
        %v955 = vlaneseq
        %v956 = vshrl.u32 %v955, 7
        %v957 = vsub.s32 0, %v956
        %v958 = vrot.slane %v953, %v957
        %959 = vset.pattern.permute.xlu0 3
        %960 = vperm.xlu0 %959, %v468
        %v961 = vpop.permute.xlu0 %960
        %v963 = vlaneseq
        %v964 = vshrl.u32 %v963, 7
        %v965 = vsub.s32 0, %v964
        %v966 = vrot.slane %v961, %v965
        %967 = vset.pattern.permute.xlu0 3
        %968 = vperm.xlu0 %967, %v469
        %v969 = vpop.permute.xlu0 %968
        %v971 = vlaneseq
        %v972 = vshrl.u32 %v971, 7
        %v973 = vsub.s32 0, %v972
        %v974 = vrot.slane %v969, %v973
        %975 = vset.pattern.permute.xlu0 3
        %976 = vperm.xlu0 %975, %v470
        %v977 = vpop.permute.xlu0 %976
        %v979 = vlaneseq
        %v980 = vshrl.u32 %v979, 7
        %v981 = vsub.s32 0, %v980
        %v982 = vrot.slane %v977, %v981
        %v985 = vcombine.low %v785, %v786
        %v986 = vcombine.high %v785, %v786
        %v988 = vunpack.c.l.s4 1966171168
        %v989 = vunpack.c.0.s8 %v988
        %v990 = vlaneseq
        %v991 = vshrl.u32 %v990, 7
        %v992 = vsub.s32 %v989, %v991
        %v993 = vrot.slane %v985, %v992
        %v995 = vunpack.c.l.s4 1966171168
        %v996 = vunpack.c.0.s8 %v995
        %v997 = vlaneseq
        %v998 = vshrl.u32 %v997, 7
        %v999 = vsub.s32 %v996, %v998
        %v1000 = vrot.slane %v986, %v999
        %v1001 = vcombine.high %v993, %v993
        %v1002 = vcombine.high %v1000, %v1000
        %v1004 = vunpack.c.l.s4 1966171168
        %v1005 = vunpack.c.0.s8 %v1004
        %v1006 = vlaneseq
        %v1007 = vshrl.u32 %v1006, 7
        %v1008 = vsub.s32 %v1005, %v1007
        %v1009 = vrot.slane %v993, %v1008
        %v1011 = vunpack.c.l.s4 1966171168
        %v1012 = vunpack.c.0.s8 %v1011
        %v1013 = vlaneseq
        %v1014 = vshrl.u32 %v1013, 7
        %v1015 = vsub.s32 %v1012, %v1014
        %v1016 = vrot.slane %v1000, %v1015
        %v1018 = vunpack.c.l.s4 1966171168
        %v1019 = vunpack.c.0.s8 %v1018
        %v1020 = vlaneseq
        %v1021 = vshrl.u32 %v1020, 7
        %v1022 = vsub.s32 %v1019, %v1021
        %v1023 = vrot.slane %v1001, %v1022
        %v1025 = vunpack.c.l.s4 1966171168
        %v1026 = vunpack.c.0.s8 %v1025
        %v1027 = vlaneseq
        %v1028 = vshrl.u32 %v1027, 7
        %v1029 = vsub.s32 %v1026, %v1028
        %v1030 = vrot.slane %v1002, %v1029
        %v1031 = vcombine.high %v1009, %v1009
        %v1032 = vcombine.high %v1016, %v1016
        %v1033 = vcombine.high %v1023, %v1023
        %v1034 = vcombine.high %v1030, %v1030
        %v1043 = vmul.f32 %v926, %v1009
        %v1044 = vmul.f32 %v934, %v1023
        %v1045 = vmul.f32 %v942, %v1031
        %v1046 = vmul.f32 %v950, %v1033
        %v1047 = vmul.f32 %v958, %v1016
        %v1048 = vmul.f32 %v966, %v1030
        %v1049 = vmul.f32 %v974, %v1032
        %v1050 = vmul.f32 %v982, %v1034
        %v1051 = vadd.f32 %v911, %v1043
        %v1052 = vadd.f32 %v912, %v1044
        %v1053 = vadd.f32 %v913, %v1045
        %v1054 = vadd.f32 %v914, %v1046
        %v1055 = vadd.f32 %v915, %v1047
        %v1056 = vadd.f32 %v916, %v1048
        %v1057 = vadd.f32 %v917, %v1049
        %v1058 = vadd.f32 %v918, %v1050
        %v1059 = vsub.f32 0.0, %v463
        %v1060 = vsub.f32 0.0, %v464
        %v1061 = vsub.f32 0.0, %v465
        %v1062 = vsub.f32 0.0, %v466
        %v1063 = vsub.f32 0.0, %v467
        %v1064 = vsub.f32 0.0, %v468
        %v1065 = vsub.f32 0.0, %v469
        %v1066 = vsub.f32 0.0, %v470
        %1068 = vset.pattern.permute.xlu0 3
        %1069 = vperm.xlu0 %1068, %v1059
        %v1070 = vpop.permute.xlu0 %1069
        %v1072 = vlaneseq
        %v1073 = vshrl.u32 %v1072, 7
        %v1074 = vsub.s32 0, %v1073
        %v1075 = vrot.slane %v1070, %v1074
        %1077 = vset.pattern.permute.xlu0 3
        %1078 = vperm.xlu0 %1077, %v1060
        %v1079 = vpop.permute.xlu0 %1078
        %v1081 = vlaneseq
        %v1082 = vshrl.u32 %v1081, 7
        %v1083 = vsub.s32 0, %v1082
        %v1084 = vrot.slane %v1079, %v1083
        %1086 = vset.pattern.permute.xlu0 3
        %1087 = vperm.xlu0 %1086, %v1061
        %v1088 = vpop.permute.xlu0 %1087
        %v1090 = vlaneseq
        %v1091 = vshrl.u32 %v1090, 7
        %v1092 = vsub.s32 0, %v1091
        %v1093 = vrot.slane %v1088, %v1092
        %1095 = vset.pattern.permute.xlu0 3
        %1096 = vperm.xlu0 %1095, %v1062
        %v1097 = vpop.permute.xlu0 %1096
        %v1099 = vlaneseq
        %v1100 = vshrl.u32 %v1099, 7
        %v1101 = vsub.s32 0, %v1100
        %v1102 = vrot.slane %v1097, %v1101
        %1104 = vset.pattern.permute.xlu0 3
        %1105 = vperm.xlu0 %1104, %v1063
        %v1106 = vpop.permute.xlu0 %1105
        %v1108 = vlaneseq
        %v1109 = vshrl.u32 %v1108, 7
        %v1110 = vsub.s32 0, %v1109
        %v1111 = vrot.slane %v1106, %v1110
        %1113 = vset.pattern.permute.xlu0 3
        %1114 = vperm.xlu0 %1113, %v1064
        %v1115 = vpop.permute.xlu0 %1114
        %v1117 = vlaneseq
        %v1118 = vshrl.u32 %v1117, 7
        %v1119 = vsub.s32 0, %v1118
        %v1120 = vrot.slane %v1115, %v1119
        %1122 = vset.pattern.permute.xlu0 3
        %1123 = vperm.xlu0 %1122, %v1065
        %v1124 = vpop.permute.xlu0 %1123
        %v1126 = vlaneseq
        %v1127 = vshrl.u32 %v1126, 7
        %v1128 = vsub.s32 0, %v1127
        %v1129 = vrot.slane %v1124, %v1128
        %1131 = vset.pattern.permute.xlu0 3
        %1132 = vperm.xlu0 %1131, %v1066
        %v1133 = vpop.permute.xlu0 %1132
        %v1135 = vlaneseq
        %v1136 = vshrl.u32 %v1135, 7
        %v1137 = vsub.s32 0, %v1136
        %v1138 = vrot.slane %v1133, %v1137
        %v1139 = vmul.f32 %v1075, %v877
        %v1140 = vmul.f32 %v1084, %v891
        %v1141 = vmul.f32 %v1093, %v899
        %v1142 = vmul.f32 %v1102, %v901
        %v1143 = vmul.f32 %v1111, %v884
        %v1144 = vmul.f32 %v1120, %v898
        %v1145 = vmul.f32 %v1129, %v900
        %v1146 = vmul.f32 %v1138, %v902
        %v1147 = vmul.f32 %v794, %v1009
        %v1148 = vmul.f32 %v802, %v1023
        %v1149 = vmul.f32 %v810, %v1031
        %v1150 = vmul.f32 %v818, %v1033
        %v1151 = vmul.f32 %v826, %v1016
        %v1152 = vmul.f32 %v834, %v1030
        %v1153 = vmul.f32 %v842, %v1032
        %v1154 = vmul.f32 %v850, %v1034
        %v1155 = vadd.f32 %v1139, %v1147
        %v1156 = vadd.f32 %v1140, %v1148
        %v1157 = vadd.f32 %v1141, %v1149
        %v1158 = vadd.f32 %v1142, %v1150
        %v1159 = vadd.f32 %v1143, %v1151
        %v1160 = vadd.f32 %v1144, %v1152
        %v1161 = vadd.f32 %v1145, %v1153
        %v1162 = vadd.f32 %v1146, %v1154
        %v1163 = vsub.f32 %v632, 12.0
        %v1164 = vsub.f32 %v633, 12.0
        %v1165 = vsub.f32 %v785, 3.25
        %v1166 = vsub.f32 %v786, 3.25
        %v1169 = vcombine.low %v1163, %v1164
        %v1170 = vcombine.high %v1163, %v1164
        %v1172 = vunpack.c.l.s4 1966171168
        %v1173 = vunpack.c.0.s8 %v1172
        %v1174 = vlaneseq
        %v1175 = vshrl.u32 %v1174, 7
        %v1176 = vsub.s32 %v1173, %v1175
        %v1177 = vrot.slane %v1169, %v1176
        %v1179 = vunpack.c.l.s4 1966171168
        %v1180 = vunpack.c.0.s8 %v1179
        %v1181 = vlaneseq
        %v1182 = vshrl.u32 %v1181, 7
        %v1183 = vsub.s32 %v1180, %v1182
        %v1184 = vrot.slane %v1170, %v1183
        %v1185 = vcombine.high %v1177, %v1177
        %v1186 = vcombine.high %v1184, %v1184
        %v1188 = vunpack.c.l.s4 1966171168
        %v1189 = vunpack.c.0.s8 %v1188
        %v1190 = vlaneseq
        %v1191 = vshrl.u32 %v1190, 7
        %v1192 = vsub.s32 %v1189, %v1191
        %v1193 = vrot.slane %v1177, %v1192
        %v1195 = vunpack.c.l.s4 1966171168
        %v1196 = vunpack.c.0.s8 %v1195
        %v1197 = vlaneseq
        %v1198 = vshrl.u32 %v1197, 7
        %v1199 = vsub.s32 %v1196, %v1198
        %v1200 = vrot.slane %v1184, %v1199
        %v1202 = vunpack.c.l.s4 1966171168
        %v1203 = vunpack.c.0.s8 %v1202
        %v1204 = vlaneseq
        %v1205 = vshrl.u32 %v1204, 7
        %v1206 = vsub.s32 %v1203, %v1205
        %v1207 = vrot.slane %v1185, %v1206
        %v1209 = vunpack.c.l.s4 1966171168
        %v1210 = vunpack.c.0.s8 %v1209
        %v1211 = vlaneseq
        %v1212 = vshrl.u32 %v1211, 7
        %v1213 = vsub.s32 %v1210, %v1212
        %v1214 = vrot.slane %v1186, %v1213
        %v1215 = vcombine.high %v1193, %v1193
        %v1216 = vcombine.high %v1200, %v1200
        %v1217 = vcombine.high %v1207, %v1207
        %v1218 = vcombine.high %v1214, %v1214
        %v1227 = vmul.f32 %v794, %v1193
        %v1228 = vmul.f32 %v802, %v1207
        %v1229 = vmul.f32 %v810, %v1215
        %v1230 = vmul.f32 %v818, %v1217
        %v1231 = vmul.f32 %v826, %v1200
        %v1232 = vmul.f32 %v834, %v1214
        %v1233 = vmul.f32 %v842, %v1216
        %v1234 = vmul.f32 %v850, %v1218
        %v1237 = vcombine.low %v1165, %v1166
        %v1238 = vcombine.high %v1165, %v1166
        %v1240 = vunpack.c.l.s4 1966171168
        %v1241 = vunpack.c.0.s8 %v1240
        %v1242 = vlaneseq
        %v1243 = vshrl.u32 %v1242, 7
        %v1244 = vsub.s32 %v1241, %v1243
        %v1245 = vrot.slane %v1237, %v1244
        %v1247 = vunpack.c.l.s4 1966171168
        %v1248 = vunpack.c.0.s8 %v1247
        %v1249 = vlaneseq
        %v1250 = vshrl.u32 %v1249, 7
        %v1251 = vsub.s32 %v1248, %v1250
        %v1252 = vrot.slane %v1238, %v1251
        %v1253 = vcombine.high %v1245, %v1245
        %v1254 = vcombine.high %v1252, %v1252
        %v1256 = vunpack.c.l.s4 1966171168
        %v1257 = vunpack.c.0.s8 %v1256
        %v1258 = vlaneseq
        %v1259 = vshrl.u32 %v1258, 7
        %v1260 = vsub.s32 %v1257, %v1259
        %v1261 = vrot.slane %v1245, %v1260
        %v1263 = vunpack.c.l.s4 1966171168
        %v1264 = vunpack.c.0.s8 %v1263
        %v1265 = vlaneseq
        %v1266 = vshrl.u32 %v1265, 7
        %v1267 = vsub.s32 %v1264, %v1266
        %v1268 = vrot.slane %v1252, %v1267
        %v1270 = vunpack.c.l.s4 1966171168
        %v1271 = vunpack.c.0.s8 %v1270
        %v1272 = vlaneseq
        %v1273 = vshrl.u32 %v1272, 7
        %v1274 = vsub.s32 %v1271, %v1273
        %v1275 = vrot.slane %v1253, %v1274
        %v1277 = vunpack.c.l.s4 1966171168
        %v1278 = vunpack.c.0.s8 %v1277
        %v1279 = vlaneseq
        %v1280 = vshrl.u32 %v1279, 7
        %v1281 = vsub.s32 %v1278, %v1280
        %v1282 = vrot.slane %v1254, %v1281
        %v1283 = vcombine.high %v1261, %v1261
        %v1284 = vcombine.high %v1268, %v1268
        %v1285 = vcombine.high %v1275, %v1275
        %v1286 = vcombine.high %v1282, %v1282
        %v1295 = vmul.f32 %v926, %v1261
        %v1296 = vmul.f32 %v934, %v1275
        %v1297 = vmul.f32 %v942, %v1283
        %v1298 = vmul.f32 %v950, %v1285
        %v1299 = vmul.f32 %v958, %v1268
        %v1300 = vmul.f32 %v966, %v1282
        %v1301 = vmul.f32 %v974, %v1284
        %v1302 = vmul.f32 %v982, %v1286
        %v1303 = vadd.f32 %v1227, %v1295
        %v1304 = vadd.f32 %v1228, %v1296
        %v1305 = vadd.f32 %v1229, %v1297
        %v1306 = vadd.f32 %v1230, %v1298
        %v1307 = vadd.f32 %v1231, %v1299
        %v1308 = vadd.f32 %v1232, %v1300
        %v1309 = vadd.f32 %v1233, %v1301
        %v1310 = vadd.f32 %v1234, %v1302
        %v1311 = vmul.f32 %v1075, %v1193
        %v1312 = vmul.f32 %v1084, %v1207
        %v1313 = vmul.f32 %v1093, %v1215
        %v1314 = vmul.f32 %v1102, %v1217
        %v1315 = vmul.f32 %v1111, %v1200
        %v1316 = vmul.f32 %v1120, %v1214
        %v1317 = vmul.f32 %v1129, %v1216
        %v1318 = vmul.f32 %v1138, %v1218
        %v1319 = vmul.f32 %v794, %v1261
        %v1320 = vmul.f32 %v802, %v1275
        %v1321 = vmul.f32 %v810, %v1283
        %v1322 = vmul.f32 %v818, %v1285
        %v1323 = vmul.f32 %v826, %v1268
        %v1324 = vmul.f32 %v834, %v1282
        %v1325 = vmul.f32 %v842, %v1284
        %v1326 = vmul.f32 %v850, %v1286
        %v1327 = vadd.f32 %v1311, %v1319
        %v1328 = vadd.f32 %v1312, %v1320
        %v1329 = vadd.f32 %v1313, %v1321
        %v1330 = vadd.f32 %v1314, %v1322
        %v1331 = vadd.f32 %v1315, %v1323
        %v1332 = vadd.f32 %v1316, %v1324
        %v1333 = vadd.f32 %v1317, %v1325
        %v1334 = vadd.f32 %v1318, %v1326
        %v1335 = vand.u32 2147483647, %v1051
        %v1336 = vand.u32 2147483647, %v1052
        %v1337 = vand.u32 2147483647, %v1053
        %v1338 = vand.u32 2147483647, %v1054
        %v1339 = vand.u32 2147483647, %v1055
        %v1340 = vand.u32 2147483647, %v1056
        %v1341 = vand.u32 2147483647, %v1057
        %v1342 = vand.u32 2147483647, %v1058
        %v1343 = vsub.f32 1.7, %v1335
        %v1344 = vsub.f32 1.7, %v1336
        %v1345 = vsub.f32 1.7, %v1337
        %v1346 = vsub.f32 1.7, %v1338
        %v1347 = vsub.f32 1.7, %v1339
        %v1348 = vsub.f32 1.7, %v1340
        %v1349 = vsub.f32 1.7, %v1341
        %v1350 = vsub.f32 1.7, %v1342
        %v1351 = vmul.f32 %v1343, 1.1
        %v1352 = vmul.f32 %v1344, 1.1
        %v1353 = vmul.f32 %v1345, 1.1
        %v1354 = vmul.f32 %v1346, 1.1
        %v1355 = vmul.f32 %v1347, 1.1
        %v1356 = vmul.f32 %v1348, 1.1
        %v1357 = vmul.f32 %v1349, 1.1
        %v1358 = vmul.f32 %v1350, 1.1
        %v1359 = vxor.u32 %v1351, 2147483648
        %v1360 = vxor.u32 %v1352, 2147483648
        %v1361 = vxor.u32 %v1353, 2147483648
        %v1362 = vxor.u32 %v1354, 2147483648
        %v1363 = vxor.u32 %v1355, 2147483648
        %v1364 = vxor.u32 %v1356, 2147483648
        %v1365 = vxor.u32 %v1357, 2147483648
        %v1366 = vxor.u32 %v1358, 2147483648
        %v1367 = vmul.f32 %v1359, 1.442695
        %v1368 = vpow.pop %v1367
        %v1369 = vmul.f32 %v1360, 1.442695
        %v1370 = vpow.pop %v1369
        %v1371 = vmul.f32 %v1361, 1.442695
        %v1372 = vpow.pop %v1371
        %v1373 = vmul.f32 %v1362, 1.442695
        %v1374 = vpow.pop %v1373
        %v1375 = vmul.f32 %v1363, 1.442695
        %v1376 = vpow.pop %v1375
        %v1377 = vmul.f32 %v1364, 1.442695
        %v1378 = vpow.pop %v1377
        %v1379 = vmul.f32 %v1365, 1.442695
        %v1380 = vpow.pop %v1379
        %v1381 = vmul.f32 %v1366, 1.442695
        %v1382 = vpow.pop %v1381
        %v1383 = vadd.f32 %v1368, 1.0
        %v1384 = vadd.f32 %v1370, 1.0
        %v1385 = vadd.f32 %v1372, 1.0
        %v1386 = vadd.f32 %v1374, 1.0
        %v1387 = vadd.f32 %v1376, 1.0
        %v1388 = vadd.f32 %v1378, 1.0
        %v1389 = vadd.f32 %v1380, 1.0
        %v1390 = vadd.f32 %v1382, 1.0
        %v1391 = vrcp.pop %v1383
        %v1392 = vmul.f32 1.0, %v1391
        %v1393 = vrcp.pop %v1384
        %v1394 = vmul.f32 1.0, %v1393
        %v1395 = vrcp.pop %v1385
        %v1396 = vmul.f32 1.0, %v1395
        %v1397 = vrcp.pop %v1386
        %v1398 = vmul.f32 1.0, %v1397
        %v1399 = vrcp.pop %v1387
        %v1400 = vmul.f32 1.0, %v1399
        %v1401 = vrcp.pop %v1388
        %v1402 = vmul.f32 1.0, %v1401
        %v1403 = vrcp.pop %v1389
        %v1404 = vmul.f32 1.0, %v1403
        %v1405 = vrcp.pop %v1390
        %v1406 = vmul.f32 1.0, %v1405
        %v1407 = vand.u32 2147483647, %v1155
        %v1408 = vand.u32 2147483647, %v1156
        %v1409 = vand.u32 2147483647, %v1157
        %v1410 = vand.u32 2147483647, %v1158
        %v1411 = vand.u32 2147483647, %v1159
        %v1412 = vand.u32 2147483647, %v1160
        %v1413 = vand.u32 2147483647, %v1161
        %v1414 = vand.u32 2147483647, %v1162
        %1415 = vset.pattern.permute.xlu0 4
        %1416 = vperm.xlu0 %1415, %v463
        %v1417 = vpop.permute.xlu0 %1416
        %v1419 = vlaneseq
        %v1420 = vshrl.u32 %v1419, 7
        %v1421 = vsub.s32 0, %v1420
        %v1422 = vrot.slane %v1417, %v1421
        %1423 = vset.pattern.permute.xlu0 4
        %1424 = vperm.xlu0 %1423, %v464
        %v1425 = vpop.permute.xlu0 %1424
        %v1427 = vlaneseq
        %v1428 = vshrl.u32 %v1427, 7
        %v1429 = vsub.s32 0, %v1428
        %v1430 = vrot.slane %v1425, %v1429
        %1431 = vset.pattern.permute.xlu0 4
        %1432 = vperm.xlu0 %1431, %v465
        %v1433 = vpop.permute.xlu0 %1432
        %v1435 = vlaneseq
        %v1436 = vshrl.u32 %v1435, 7
        %v1437 = vsub.s32 0, %v1436
        %v1438 = vrot.slane %v1433, %v1437
        %1439 = vset.pattern.permute.xlu0 4
        %1440 = vperm.xlu0 %1439, %v466
        %v1441 = vpop.permute.xlu0 %1440
        %v1443 = vlaneseq
        %v1444 = vshrl.u32 %v1443, 7
        %v1445 = vsub.s32 0, %v1444
        %v1446 = vrot.slane %v1441, %v1445
        %1447 = vset.pattern.permute.xlu0 4
        %1448 = vperm.xlu0 %1447, %v467
        %v1449 = vpop.permute.xlu0 %1448
        %v1451 = vlaneseq
        %v1452 = vshrl.u32 %v1451, 7
        %v1453 = vsub.s32 0, %v1452
        %v1454 = vrot.slane %v1449, %v1453
        %1455 = vset.pattern.permute.xlu0 4
        %1456 = vperm.xlu0 %1455, %v468
        %v1457 = vpop.permute.xlu0 %1456
        %v1459 = vlaneseq
        %v1460 = vshrl.u32 %v1459, 7
        %v1461 = vsub.s32 0, %v1460
        %v1462 = vrot.slane %v1457, %v1461
        %1463 = vset.pattern.permute.xlu0 4
        %1464 = vperm.xlu0 %1463, %v469
        %v1465 = vpop.permute.xlu0 %1464
        %v1467 = vlaneseq
        %v1468 = vshrl.u32 %v1467, 7
        %v1469 = vsub.s32 0, %v1468
        %v1470 = vrot.slane %v1465, %v1469
        %1471 = vset.pattern.permute.xlu0 4
        %1472 = vperm.xlu0 %1471, %v470
        %v1473 = vpop.permute.xlu0 %1472
        %v1475 = vlaneseq
        %v1476 = vshrl.u32 %v1475, 7
        %v1477 = vsub.s32 0, %v1476
        %v1478 = vrot.slane %v1473, %v1477
        %v1479 = vsub.f32 %v1422, %v1407
        %v1480 = vsub.f32 %v1430, %v1408
        %v1481 = vsub.f32 %v1438, %v1409
        %v1482 = vsub.f32 %v1446, %v1410
        %v1483 = vsub.f32 %v1454, %v1411
        %v1484 = vsub.f32 %v1462, %v1412
        %v1485 = vsub.f32 %v1470, %v1413
        %v1486 = vsub.f32 %v1478, %v1414
        %v1487 = vmul.f32 %v1479, 1.1
        %v1488 = vmul.f32 %v1480, 1.1
        %v1489 = vmul.f32 %v1481, 1.1
        %v1490 = vmul.f32 %v1482, 1.1
        %v1491 = vmul.f32 %v1483, 1.1
        %v1492 = vmul.f32 %v1484, 1.1
        %v1493 = vmul.f32 %v1485, 1.1
        %v1494 = vmul.f32 %v1486, 1.1
        %v1495 = vxor.u32 %v1487, 2147483648
        %v1496 = vxor.u32 %v1488, 2147483648
        %v1497 = vxor.u32 %v1489, 2147483648
        %v1498 = vxor.u32 %v1490, 2147483648
        %v1499 = vxor.u32 %v1491, 2147483648
        %v1500 = vxor.u32 %v1492, 2147483648
        %v1501 = vxor.u32 %v1493, 2147483648
        %v1502 = vxor.u32 %v1494, 2147483648
        %v1503 = vmul.f32 %v1495, 1.442695
        %v1504 = vpow.pop %v1503
        %v1505 = vmul.f32 %v1496, 1.442695
        %v1506 = vpow.pop %v1505
        %v1507 = vmul.f32 %v1497, 1.442695
        %v1508 = vpow.pop %v1507
        %v1509 = vmul.f32 %v1498, 1.442695
        %v1510 = vpow.pop %v1509
        %v1511 = vmul.f32 %v1499, 1.442695
        %v1512 = vpow.pop %v1511
        %v1513 = vmul.f32 %v1500, 1.442695
        %v1514 = vpow.pop %v1513
        %v1515 = vmul.f32 %v1501, 1.442695
        %v1516 = vpow.pop %v1515
        %v1517 = vmul.f32 %v1502, 1.442695
        %v1518 = vpow.pop %v1517
        %v1519 = vadd.f32 %v1504, 1.0
        %v1520 = vadd.f32 %v1506, 1.0
        %v1521 = vadd.f32 %v1508, 1.0
        %v1522 = vadd.f32 %v1510, 1.0
        %v1523 = vadd.f32 %v1512, 1.0
        %v1524 = vadd.f32 %v1514, 1.0
        %v1525 = vadd.f32 %v1516, 1.0
        %v1526 = vadd.f32 %v1518, 1.0
        %v1527 = vrcp.pop %v1519
        %v1528 = vmul.f32 1.0, %v1527
        %v1529 = vrcp.pop %v1520
        %v1530 = vmul.f32 1.0, %v1529
        %v1531 = vrcp.pop %v1521
        %v1532 = vmul.f32 1.0, %v1531
        %v1533 = vrcp.pop %v1522
        %v1534 = vmul.f32 1.0, %v1533
        %v1535 = vrcp.pop %v1523
        %v1536 = vmul.f32 1.0, %v1535
        %v1537 = vrcp.pop %v1524
        %v1538 = vmul.f32 1.0, %v1537
        %v1539 = vrcp.pop %v1525
        %v1540 = vmul.f32 1.0, %v1539
        %v1541 = vrcp.pop %v1526
        %v1542 = vmul.f32 1.0, %v1541
        %v1543 = vmul.f32 %v1392, %v1528
        %v1544 = vmul.f32 %v1394, %v1530
        %v1545 = vmul.f32 %v1396, %v1532
        %v1546 = vmul.f32 %v1398, %v1534
        %v1547 = vmul.f32 %v1400, %v1536
        %v1548 = vmul.f32 %v1402, %v1538
        %v1549 = vmul.f32 %v1404, %v1540
        %v1550 = vmul.f32 %v1406, %v1542
        %v1551 = vsub.f32 1.05, %v1335
        %v1552 = vsub.f32 1.05, %v1336
        %v1553 = vsub.f32 1.05, %v1337
        %v1554 = vsub.f32 1.05, %v1338
        %v1555 = vsub.f32 1.05, %v1339
        %v1556 = vsub.f32 1.05, %v1340
        %v1557 = vsub.f32 1.05, %v1341
        %v1558 = vsub.f32 1.05, %v1342
        %v1559 = vmul.f32 %v1551, 1.1
        %v1560 = vmul.f32 %v1552, 1.1
        %v1561 = vmul.f32 %v1553, 1.1
        %v1562 = vmul.f32 %v1554, 1.1
        %v1563 = vmul.f32 %v1555, 1.1
        %v1564 = vmul.f32 %v1556, 1.1
        %v1565 = vmul.f32 %v1557, 1.1
        %v1566 = vmul.f32 %v1558, 1.1
        %v1567 = vxor.u32 %v1559, 2147483648
        %v1568 = vxor.u32 %v1560, 2147483648
        %v1569 = vxor.u32 %v1561, 2147483648
        %v1570 = vxor.u32 %v1562, 2147483648
        %v1571 = vxor.u32 %v1563, 2147483648
        %v1572 = vxor.u32 %v1564, 2147483648
        %v1573 = vxor.u32 %v1565, 2147483648
        %v1574 = vxor.u32 %v1566, 2147483648
        %v1575 = vmul.f32 %v1567, 1.442695
        %v1576 = vpow.pop %v1575
        %v1577 = vmul.f32 %v1568, 1.442695
        %v1578 = vpow.pop %v1577
        %v1579 = vmul.f32 %v1569, 1.442695
        %v1580 = vpow.pop %v1579
        %v1581 = vmul.f32 %v1570, 1.442695
        %v1582 = vpow.pop %v1581
        %v1583 = vmul.f32 %v1571, 1.442695
        %v1584 = vpow.pop %v1583
        %v1585 = vmul.f32 %v1572, 1.442695
        %v1586 = vpow.pop %v1585
        %v1587 = vmul.f32 %v1573, 1.442695
        %v1588 = vpow.pop %v1587
        %v1589 = vmul.f32 %v1574, 1.442695
        %v1590 = vpow.pop %v1589
        %v1591 = vadd.f32 %v1576, 1.0
        %v1592 = vadd.f32 %v1578, 1.0
        %v1593 = vadd.f32 %v1580, 1.0
        %v1594 = vadd.f32 %v1582, 1.0
        %v1595 = vadd.f32 %v1584, 1.0
        %v1596 = vadd.f32 %v1586, 1.0
        %v1597 = vadd.f32 %v1588, 1.0
        %v1598 = vadd.f32 %v1590, 1.0
        %v1599 = vrcp.pop %v1591
        %v1600 = vmul.f32 1.0, %v1599
        %v1601 = vrcp.pop %v1592
        %v1602 = vmul.f32 1.0, %v1601
        %v1603 = vrcp.pop %v1593
        %v1604 = vmul.f32 1.0, %v1603
        %v1605 = vrcp.pop %v1594
        %v1606 = vmul.f32 1.0, %v1605
        %v1607 = vrcp.pop %v1595
        %v1608 = vmul.f32 1.0, %v1607
        %v1609 = vrcp.pop %v1596
        %v1610 = vmul.f32 1.0, %v1609
        %v1611 = vrcp.pop %v1597
        %v1612 = vmul.f32 1.0, %v1611
        %v1613 = vrcp.pop %v1598
        %v1614 = vmul.f32 1.0, %v1613
        %v1615 = vsub.f32 2.45, %v1407
        %v1616 = vsub.f32 2.45, %v1408
        %v1617 = vsub.f32 2.45, %v1409
        %v1618 = vsub.f32 2.45, %v1410
        %v1619 = vsub.f32 2.45, %v1411
        %v1620 = vsub.f32 2.45, %v1412
        %v1621 = vsub.f32 2.45, %v1413
        %v1622 = vsub.f32 2.45, %v1414
        %v1623 = vmul.f32 %v1615, 1.1
        %v1624 = vmul.f32 %v1616, 1.1
        %v1625 = vmul.f32 %v1617, 1.1
        %v1626 = vmul.f32 %v1618, 1.1
        %v1627 = vmul.f32 %v1619, 1.1
        %v1628 = vmul.f32 %v1620, 1.1
        %v1629 = vmul.f32 %v1621, 1.1
        %v1630 = vmul.f32 %v1622, 1.1
        %v1631 = vxor.u32 %v1623, 2147483648
        %v1632 = vxor.u32 %v1624, 2147483648
        %v1633 = vxor.u32 %v1625, 2147483648
        %v1634 = vxor.u32 %v1626, 2147483648
        %v1635 = vxor.u32 %v1627, 2147483648
        %v1636 = vxor.u32 %v1628, 2147483648
        %v1637 = vxor.u32 %v1629, 2147483648
        %v1638 = vxor.u32 %v1630, 2147483648
        %v1639 = vmul.f32 %v1631, 1.442695
        %v1640 = vpow.pop %v1639
        %v1641 = vmul.f32 %v1632, 1.442695
        %v1642 = vpow.pop %v1641
        %v1643 = vmul.f32 %v1633, 1.442695
        %v1644 = vpow.pop %v1643
        %v1645 = vmul.f32 %v1634, 1.442695
        %v1646 = vpow.pop %v1645
        %v1647 = vmul.f32 %v1635, 1.442695
        %v1648 = vpow.pop %v1647
        %v1649 = vmul.f32 %v1636, 1.442695
        %v1650 = vpow.pop %v1649
        %v1651 = vmul.f32 %v1637, 1.442695
        %v1652 = vpow.pop %v1651
        %v1653 = vmul.f32 %v1638, 1.442695
        %v1654 = vpow.pop %v1653
        %v1655 = vadd.f32 %v1640, 1.0
        %v1656 = vadd.f32 %v1642, 1.0
        %v1657 = vadd.f32 %v1644, 1.0
        %v1658 = vadd.f32 %v1646, 1.0
        %v1659 = vadd.f32 %v1648, 1.0
        %v1660 = vadd.f32 %v1650, 1.0
        %v1661 = vadd.f32 %v1652, 1.0
        %v1662 = vadd.f32 %v1654, 1.0
        %v1663 = vrcp.pop %v1655
        %v1664 = vmul.f32 1.0, %v1663
        %v1665 = vrcp.pop %v1656
        %v1666 = vmul.f32 1.0, %v1665
        %v1667 = vrcp.pop %v1657
        %v1668 = vmul.f32 1.0, %v1667
        %v1669 = vrcp.pop %v1658
        %v1670 = vmul.f32 1.0, %v1669
        %v1671 = vrcp.pop %v1659
        %v1672 = vmul.f32 1.0, %v1671
        %v1673 = vrcp.pop %v1660
        %v1674 = vmul.f32 1.0, %v1673
        %v1675 = vrcp.pop %v1661
        %v1676 = vmul.f32 1.0, %v1675
        %v1677 = vrcp.pop %v1662
        %v1678 = vmul.f32 1.0, %v1677
        %v1679 = vmul.f32 %v1600, %v1664
        %v1680 = vmul.f32 %v1602, %v1666
        %v1681 = vmul.f32 %v1604, %v1668
        %v1682 = vmul.f32 %v1606, %v1670
        %v1683 = vmul.f32 %v1608, %v1672
        %v1684 = vmul.f32 %v1610, %v1674
        %v1685 = vmul.f32 %v1612, %v1676
        %v1686 = vmul.f32 %v1614, %v1678
        %v1687 = vand.u32 2147483647, %v1303
        %v1688 = vand.u32 2147483647, %v1304
        %v1689 = vand.u32 2147483647, %v1305
        %v1690 = vand.u32 2147483647, %v1306
        %v1691 = vand.u32 2147483647, %v1307
        %v1692 = vand.u32 2147483647, %v1308
        %v1693 = vand.u32 2147483647, %v1309
        %v1694 = vand.u32 2147483647, %v1310
        %v1695 = vsub.f32 3.1, %v1687
        %v1696 = vsub.f32 3.1, %v1688
        %v1697 = vsub.f32 3.1, %v1689
        %v1698 = vsub.f32 3.1, %v1690
        %v1699 = vsub.f32 3.1, %v1691
        %v1700 = vsub.f32 3.1, %v1692
        %v1701 = vsub.f32 3.1, %v1693
        %v1702 = vsub.f32 3.1, %v1694
        %v1703 = vmul.f32 %v1695, 1.1
        %v1704 = vmul.f32 %v1696, 1.1
        %v1705 = vmul.f32 %v1697, 1.1
        %v1706 = vmul.f32 %v1698, 1.1
        %v1707 = vmul.f32 %v1699, 1.1
        %v1708 = vmul.f32 %v1700, 1.1
        %v1709 = vmul.f32 %v1701, 1.1
        %v1710 = vmul.f32 %v1702, 1.1
        %v1711 = vxor.u32 %v1703, 2147483648
        %v1712 = vxor.u32 %v1704, 2147483648
        %v1713 = vxor.u32 %v1705, 2147483648
        %v1714 = vxor.u32 %v1706, 2147483648
        %v1715 = vxor.u32 %v1707, 2147483648
        %v1716 = vxor.u32 %v1708, 2147483648
        %v1717 = vxor.u32 %v1709, 2147483648
        %v1718 = vxor.u32 %v1710, 2147483648
        %v1719 = vmul.f32 %v1711, 1.442695
        %v1720 = vpow.pop %v1719
        %v1721 = vmul.f32 %v1712, 1.442695
        %v1722 = vpow.pop %v1721
        %v1723 = vmul.f32 %v1713, 1.442695
        %v1724 = vpow.pop %v1723
        %v1725 = vmul.f32 %v1714, 1.442695
        %v1726 = vpow.pop %v1725
        %v1727 = vmul.f32 %v1715, 1.442695
        %v1728 = vpow.pop %v1727
        %v1729 = vmul.f32 %v1716, 1.442695
        %v1730 = vpow.pop %v1729
        %v1731 = vmul.f32 %v1717, 1.442695
        %v1732 = vpow.pop %v1731
        %v1733 = vmul.f32 %v1718, 1.442695
        %v1734 = vpow.pop %v1733
        %v1735 = vadd.f32 %v1720, 1.0
        %v1736 = vadd.f32 %v1722, 1.0
        %v1737 = vadd.f32 %v1724, 1.0
        %v1738 = vadd.f32 %v1726, 1.0
        %v1739 = vadd.f32 %v1728, 1.0
        %v1740 = vadd.f32 %v1730, 1.0
        %v1741 = vadd.f32 %v1732, 1.0
        %v1742 = vadd.f32 %v1734, 1.0
        %v1743 = vrcp.pop %v1735
        %v1744 = vmul.f32 1.0, %v1743
        %v1745 = vrcp.pop %v1736
        %v1746 = vmul.f32 1.0, %v1745
        %v1747 = vrcp.pop %v1737
        %v1748 = vmul.f32 1.0, %v1747
        %v1749 = vrcp.pop %v1738
        %v1750 = vmul.f32 1.0, %v1749
        %v1751 = vrcp.pop %v1739
        %v1752 = vmul.f32 1.0, %v1751
        %v1753 = vrcp.pop %v1740
        %v1754 = vmul.f32 1.0, %v1753
        %v1755 = vrcp.pop %v1741
        %v1756 = vmul.f32 1.0, %v1755
        %v1757 = vrcp.pop %v1742
        %v1758 = vmul.f32 1.0, %v1757
        %v1759 = vand.u32 2147483647, %v1327
        %v1760 = vand.u32 2147483647, %v1328
        %v1761 = vand.u32 2147483647, %v1329
        %v1762 = vand.u32 2147483647, %v1330
        %v1763 = vand.u32 2147483647, %v1331
        %v1764 = vand.u32 2147483647, %v1332
        %v1765 = vand.u32 2147483647, %v1333
        %v1766 = vand.u32 2147483647, %v1334
        %1767 = vset.pattern.permute.xlu0 5
        %1768 = vperm.xlu0 %1767, %v463
        %v1769 = vpop.permute.xlu0 %1768
        %v1771 = vlaneseq
        %v1772 = vshrl.u32 %v1771, 7
        %v1773 = vsub.s32 0, %v1772
        %v1774 = vrot.slane %v1769, %v1773
        %1775 = vset.pattern.permute.xlu0 5
        %1776 = vperm.xlu0 %1775, %v464
        %v1777 = vpop.permute.xlu0 %1776
        %v1779 = vlaneseq
        %v1780 = vshrl.u32 %v1779, 7
        %v1781 = vsub.s32 0, %v1780
        %v1782 = vrot.slane %v1777, %v1781
        %1783 = vset.pattern.permute.xlu0 5
        %1784 = vperm.xlu0 %1783, %v465
        %v1785 = vpop.permute.xlu0 %1784
        %v1787 = vlaneseq
        %v1788 = vshrl.u32 %v1787, 7
        %v1789 = vsub.s32 0, %v1788
        %v1790 = vrot.slane %v1785, %v1789
        %1791 = vset.pattern.permute.xlu0 5
        %1792 = vperm.xlu0 %1791, %v466
        %v1793 = vpop.permute.xlu0 %1792
        %v1795 = vlaneseq
        %v1796 = vshrl.u32 %v1795, 7
        %v1797 = vsub.s32 0, %v1796
        %v1798 = vrot.slane %v1793, %v1797
        %1799 = vset.pattern.permute.xlu0 5
        %1800 = vperm.xlu0 %1799, %v467
        %v1801 = vpop.permute.xlu0 %1800
        %v1803 = vlaneseq
        %v1804 = vshrl.u32 %v1803, 7
        %v1805 = vsub.s32 0, %v1804
        %v1806 = vrot.slane %v1801, %v1805
        %1807 = vset.pattern.permute.xlu0 5
        %1808 = vperm.xlu0 %1807, %v468
        %v1809 = vpop.permute.xlu0 %1808
        %v1811 = vlaneseq
        %v1812 = vshrl.u32 %v1811, 7
        %v1813 = vsub.s32 0, %v1812
        %v1814 = vrot.slane %v1809, %v1813
        %1815 = vset.pattern.permute.xlu0 5
        %1816 = vperm.xlu0 %1815, %v469
        %v1817 = vpop.permute.xlu0 %1816
        %v1819 = vlaneseq
        %v1820 = vshrl.u32 %v1819, 7
        %v1821 = vsub.s32 0, %v1820
        %v1822 = vrot.slane %v1817, %v1821
        %1823 = vset.pattern.permute.xlu0 5
        %1824 = vperm.xlu0 %1823, %v470
        %v1825 = vpop.permute.xlu0 %1824
        %v1827 = vlaneseq
        %v1828 = vshrl.u32 %v1827, 7
        %v1829 = vsub.s32 0, %v1828
        %v1830 = vrot.slane %v1825, %v1829
        %v1831 = vsub.f32 %v1774, %v1759
        %v1832 = vsub.f32 %v1782, %v1760
        %v1833 = vsub.f32 %v1790, %v1761
        %v1834 = vsub.f32 %v1798, %v1762
        %v1835 = vsub.f32 %v1806, %v1763
        %v1836 = vsub.f32 %v1814, %v1764
        %v1837 = vsub.f32 %v1822, %v1765
        %v1838 = vsub.f32 %v1830, %v1766
        %v1839 = vmul.f32 %v1831, 1.1
        %v1840 = vmul.f32 %v1832, 1.1
        %v1841 = vmul.f32 %v1833, 1.1
        %v1842 = vmul.f32 %v1834, 1.1
        %v1843 = vmul.f32 %v1835, 1.1
        %v1844 = vmul.f32 %v1836, 1.1
        %v1845 = vmul.f32 %v1837, 1.1
        %v1846 = vmul.f32 %v1838, 1.1
        %v1847 = vxor.u32 %v1839, 2147483648
        %v1848 = vxor.u32 %v1840, 2147483648
        %v1849 = vxor.u32 %v1841, 2147483648
        %v1850 = vxor.u32 %v1842, 2147483648
        %v1851 = vxor.u32 %v1843, 2147483648
        %v1852 = vxor.u32 %v1844, 2147483648
        %v1853 = vxor.u32 %v1845, 2147483648
        %v1854 = vxor.u32 %v1846, 2147483648
        %v1855 = vmul.f32 %v1847, 1.442695
        %v1856 = vpow.pop %v1855
        %v1857 = vmul.f32 %v1848, 1.442695
        %v1858 = vpow.pop %v1857
        %v1859 = vmul.f32 %v1849, 1.442695
        %v1860 = vpow.pop %v1859
        %v1861 = vmul.f32 %v1850, 1.442695
        %v1862 = vpow.pop %v1861
        %v1863 = vmul.f32 %v1851, 1.442695
        %v1864 = vpow.pop %v1863
        %v1865 = vmul.f32 %v1852, 1.442695
        %v1866 = vpow.pop %v1865
        %v1867 = vmul.f32 %v1853, 1.442695
        %v1868 = vpow.pop %v1867
        %v1869 = vmul.f32 %v1854, 1.442695
        %v1870 = vpow.pop %v1869
        %v1871 = vadd.f32 %v1856, 1.0
        %v1872 = vadd.f32 %v1858, 1.0
        %v1873 = vadd.f32 %v1860, 1.0
        %v1874 = vadd.f32 %v1862, 1.0
        %v1875 = vadd.f32 %v1864, 1.0
        %v1876 = vadd.f32 %v1866, 1.0
        %v1877 = vadd.f32 %v1868, 1.0
        %v1878 = vadd.f32 %v1870, 1.0
        %v1879 = vrcp.pop %v1871
        %v1880 = vmul.f32 1.0, %v1879
        %v1881 = vrcp.pop %v1872
        %v1882 = vmul.f32 1.0, %v1881
        %v1883 = vrcp.pop %v1873
        %v1884 = vmul.f32 1.0, %v1883
        %v1885 = vrcp.pop %v1874
        %v1886 = vmul.f32 1.0, %v1885
        %v1887 = vrcp.pop %v1875
        %v1888 = vmul.f32 1.0, %v1887
        %v1889 = vrcp.pop %v1876
        %v1890 = vmul.f32 1.0, %v1889
        %v1891 = vrcp.pop %v1877
        %v1892 = vmul.f32 1.0, %v1891
        %v1893 = vrcp.pop %v1878
        %v1894 = vmul.f32 1.0, %v1893
        %v1895 = vmul.f32 %v1744, %v1880
        %v1896 = vmul.f32 %v1746, %v1882
        %v1897 = vmul.f32 %v1748, %v1884
        %v1898 = vmul.f32 %v1750, %v1886
        %v1899 = vmul.f32 %v1752, %v1888
        %v1900 = vmul.f32 %v1754, %v1890
        %v1901 = vmul.f32 %v1756, %v1892
        %v1902 = vmul.f32 %v1758, %v1894
        %v1903 = vlaneseq
        %vm1904 = vcmp.ge.s32.totalorder %v1903, 0
        %vm1905 = vcmp.lt.s32.totalorder %v1903, 256
        %vm1906 = vmand %vm1904, %vm1905
        %1907 = vst.msk [vmem:[%s434] sm:$0x3] %vm1906, %v1543
        %1908 = vst.msk [vmem:[%s434 + $0x2] sm:$0x3] %vm1906, %v1544
        %1909 = vst.msk [vmem:[%s434 + $0x4] sm:$0x3] %vm1906, %v1545
        %1910 = vst.msk [vmem:[%s434 + $0x6] sm:$0x3] %vm1906, %v1546
        %1911 = vst.msk [vmem:[%s434 + $0x8] sm:$0x3] %vm1906, %v1547
        %1912 = vst.msk [vmem:[%s434 + $0xa] sm:$0x3] %vm1906, %v1548
        %1913 = vst.msk [vmem:[%s434 + $0xc] sm:$0x3] %vm1906, %v1549
        %1914 = vst.msk [vmem:[%s434 + $0xe] sm:$0x3] %vm1906, %v1550
        %1915 = vst.msk [vmem:[%s441] sm:$0x3] %vm1906, %v1679
        %1916 = vst.msk [vmem:[%s441 + $0x2] sm:$0x3] %vm1906, %v1680
        %1917 = vst.msk [vmem:[%s441 + $0x4] sm:$0x3] %vm1906, %v1681
        %1918 = vst.msk [vmem:[%s441 + $0x6] sm:$0x3] %vm1906, %v1682
        %1919 = vst.msk [vmem:[%s441 + $0x8] sm:$0x3] %vm1906, %v1683
        %1920 = vst.msk [vmem:[%s441 + $0xa] sm:$0x3] %vm1906, %v1684
        %1921 = vst.msk [vmem:[%s441 + $0xc] sm:$0x3] %vm1906, %v1685
        %1922 = vst.msk [vmem:[%s441 + $0xe] sm:$0x3] %vm1906, %v1686
        %1923 = vst.msk [vmem:[%s448] sm:$0x3] %vm1906, %v1895
        %1924 = vst.msk [vmem:[%s448 + $0x2] sm:$0x3] %vm1906, %v1896
        %1925 = vst.msk [vmem:[%s448 + $0x4] sm:$0x3] %vm1906, %v1897
        %1926 = vst.msk [vmem:[%s448 + $0x6] sm:$0x3] %vm1906, %v1898
        %1927 = vst.msk [vmem:[%s448 + $0x8] sm:$0x3] %vm1906, %v1899
        %1928 = vst.msk [vmem:[%s448 + $0xa] sm:$0x3] %vm1906, %v1900
        %1929 = vst.msk [vmem:[%s448 + $0xc] sm:$0x3] %vm1906, %v1901
        %1930 = vst.msk [vmem:[%s448 + $0xe] sm:$0x3] %vm1906, %v1902
        %s1931 = scalar_lea.vmem %s402, 1 [#allocation10]
        %v1932 = vld [vmem:[%s1931] ss:$8 sm:$0x3]
        %s1933 = scalar_lea.vmem %s402, 17 [#allocation10]
        %v1934 = vld [vmem:[%s1933] ss:$8 sm:$0x3]
        %s1935 = scalar_lea.vmem %s402, 33 [#allocation10]
        %v1936 = vld [vmem:[%s1935] ss:$8 sm:$0x3]
        %s1937 = scalar_lea.vmem %s402, 49 [#allocation10]
        %v1938 = vld [vmem:[%s1937] ss:$8 sm:$0x3]
        %s1939 = scalar_lea.vmem %s402, 65 [#allocation10]
        %v1940 = vld [vmem:[%s1939] ss:$8 sm:$0x3]
        %s1941 = scalar_lea.vmem %s402, 81 [#allocation10]
        %v1942 = vld [vmem:[%s1941] ss:$8 sm:$0x3]
        %s1943 = scalar_lea.vmem %s402, 97 [#allocation10]
        %v1944 = vld [vmem:[%s1943] ss:$8 sm:$0x3]
        %s1945 = scalar_lea.vmem %s402, 113 [#allocation10]
        %v1946 = vld [vmem:[%s1945] ss:$8 sm:$0x3]
        %vm1947 = vcmp.gt.f32.partialorder %v1932, 0.5
        %vm1948 = vcmp.gt.f32.partialorder %v1934, 0.5
        %vm1949 = vcmp.gt.f32.partialorder %v1936, 0.5
        %vm1950 = vcmp.gt.f32.partialorder %v1938, 0.5
        %vm1951 = vcmp.gt.f32.partialorder %v1940, 0.5
        %vm1952 = vcmp.gt.f32.partialorder %v1942, 0.5
        %vm1953 = vcmp.gt.f32.partialorder %v1944, 0.5
        %vm1954 = vcmp.gt.f32.partialorder %v1946, 0.5
        %v1955 = vsel %vm1947, %v1679, 0.0
        %v1956 = vsel %vm1948, %v1680, 0.0
        %v1957 = vsel %vm1949, %v1681, 0.0
        %v1958 = vsel %vm1950, %v1682, 0.0
        %v1959 = vsel %vm1951, %v1683, 0.0
        %v1960 = vsel %vm1952, %v1684, 0.0
        %v1961 = vsel %vm1953, %v1685, 0.0
        %v1962 = vsel %vm1954, %v1686, 0.0
        %v1971 = vcombine.low %v1955, %v1956
        %v1972 = vcombine.low %v1957, %v1958
        %v1973 = vcombine.low %v1959, %v1960
        %v1974 = vcombine.low %v1961, %v1962
        %v1976 = vunpack.c.l.s4 1966171168
        %v1977 = vunpack.c.0.s8 %v1976
        %v1978 = vlaneseq
        %v1979 = vshrl.u32 %v1978, 7
        %v1980 = vsub.s32 %v1977, %v1979
        %v1981 = vrot.slane %v1971, %v1980
        %v1983 = vunpack.c.l.s4 1966171168
        %v1984 = vunpack.c.0.s8 %v1983
        %v1985 = vlaneseq
        %v1986 = vshrl.u32 %v1985, 7
        %v1987 = vsub.s32 %v1984, %v1986
        %v1988 = vrot.slane %v1972, %v1987
        %v1990 = vunpack.c.l.s4 1966171168
        %v1991 = vunpack.c.0.s8 %v1990
        %v1992 = vlaneseq
        %v1993 = vshrl.u32 %v1992, 7
        %v1994 = vsub.s32 %v1991, %v1993
        %v1995 = vrot.slane %v1973, %v1994
        %v1997 = vunpack.c.l.s4 1966171168
        %v1998 = vunpack.c.0.s8 %v1997
        %v1999 = vlaneseq
        %v2000 = vshrl.u32 %v1999, 7
        %v2001 = vsub.s32 %v1998, %v2000
        %v2002 = vrot.slane %v1974, %v2001
        %v2003 = vcombine.low %v1981, %v1988
        %v2004 = vcombine.high %v1981, %v1988
        %v2005 = vcombine.low %v1995, %v2002
        %v2006 = vcombine.high %v1995, %v2002
        %v2008 = vunpack.c.l.s4 1966171168
        %v2009 = vunpack.c.0.s8 %v2008
        %v2010 = vlaneseq
        %v2011 = vshrl.u32 %v2010, 7
        %v2012 = vsub.s32 %v2009, %v2011
        %v2013 = vrot.slane %v2003, %v2012
        %v2015 = vunpack.c.l.s4 1966171168
        %v2016 = vunpack.c.0.s8 %v2015
        %v2017 = vlaneseq
        %v2018 = vshrl.u32 %v2017, 7
        %v2019 = vsub.s32 %v2016, %v2018
        %v2020 = vrot.slane %v2004, %v2019
        %v2022 = vunpack.c.l.s4 1966171168
        %v2023 = vunpack.c.0.s8 %v2022
        %v2024 = vlaneseq
        %v2025 = vshrl.u32 %v2024, 7
        %v2026 = vsub.s32 %v2023, %v2025
        %v2027 = vrot.slane %v2005, %v2026
        %v2029 = vunpack.c.l.s4 1966171168
        %v2030 = vunpack.c.0.s8 %v2029
        %v2031 = vlaneseq
        %v2032 = vshrl.u32 %v2031, 7
        %v2033 = vsub.s32 %v2030, %v2032
        %v2034 = vrot.slane %v2006, %v2033
        %v2035 = vcombine.low %v2013, %v2027
        %v2036 = vcombine.low %v2020, %v2034
        %v2039 = vadd.f32 %v2035, %v2036
        %2040 = vadd.xlane.f32.xlu0 %v2039
        %v2041 = vpop.xlane.xlu0 %2040
        %v2042 = vrot.slane %v2041, 4
        %v2043 = vadd.f32 %v2041, %v2042
        %v2044 = vrot.slane %v2043, 2
        %v2045 = vadd.f32 %v2043, %v2044
        %v2046 = vrot.slane %v2045, 1
        %v2047 = vadd.f32 %v2045, %v2046
        %s2048 = vtos %v2047
        %v2049 = vstv %s2048
        %s2050 = scalar_lea.vmem %s402, 2 [#allocation10]
        %v2051 = vld [vmem:[%s2050] ss:$8 sm:$0x3]
        %s2052 = scalar_lea.vmem %s402, 18 [#allocation10]
        %v2053 = vld [vmem:[%s2052] ss:$8 sm:$0x3]
        %s2054 = scalar_lea.vmem %s402, 34 [#allocation10]
        %v2055 = vld [vmem:[%s2054] ss:$8 sm:$0x3]
        %s2056 = scalar_lea.vmem %s402, 50 [#allocation10]
        %v2057 = vld [vmem:[%s2056] ss:$8 sm:$0x3]
        %s2058 = scalar_lea.vmem %s402, 66 [#allocation10]
        %v2059 = vld [vmem:[%s2058] ss:$8 sm:$0x3]
        %s2060 = scalar_lea.vmem %s402, 82 [#allocation10]
        %v2061 = vld [vmem:[%s2060] ss:$8 sm:$0x3]
        %s2062 = scalar_lea.vmem %s402, 98 [#allocation10]
        %v2063 = vld [vmem:[%s2062] ss:$8 sm:$0x3]
        %s2064 = scalar_lea.vmem %s402, 114 [#allocation10]
        %v2065 = vld [vmem:[%s2064] ss:$8 sm:$0x3]
        %vm2066 = vcmp.gt.f32.partialorder %v2051, 0.5
        %vm2067 = vcmp.gt.f32.partialorder %v2053, 0.5
        %vm2068 = vcmp.gt.f32.partialorder %v2055, 0.5
        %vm2069 = vcmp.gt.f32.partialorder %v2057, 0.5
        %vm2070 = vcmp.gt.f32.partialorder %v2059, 0.5
        %vm2071 = vcmp.gt.f32.partialorder %v2061, 0.5
        %vm2072 = vcmp.gt.f32.partialorder %v2063, 0.5
        %vm2073 = vcmp.gt.f32.partialorder %v2065, 0.5
        %v2074 = vsel %vm2066, %v1543, 0.0
        %v2075 = vsel %vm2067, %v1544, 0.0
        %v2076 = vsel %vm2068, %v1545, 0.0
        %v2077 = vsel %vm2069, %v1546, 0.0
        %v2078 = vsel %vm2070, %v1547, 0.0
        %v2079 = vsel %vm2071, %v1548, 0.0
        %v2080 = vsel %vm2072, %v1549, 0.0
        %v2081 = vsel %vm2073, %v1550, 0.0
        %v2090 = vcombine.low %v2074, %v2075
        %v2091 = vcombine.low %v2076, %v2077
        %v2092 = vcombine.low %v2078, %v2079
        %v2093 = vcombine.low %v2080, %v2081
        %v2095 = vunpack.c.l.s4 1966171168
        %v2096 = vunpack.c.0.s8 %v2095
        %v2097 = vlaneseq
        %v2098 = vshrl.u32 %v2097, 7
        %v2099 = vsub.s32 %v2096, %v2098
        %v2100 = vrot.slane %v2090, %v2099
        %v2102 = vunpack.c.l.s4 1966171168
        %v2103 = vunpack.c.0.s8 %v2102
        %v2104 = vlaneseq
        %v2105 = vshrl.u32 %v2104, 7
        %v2106 = vsub.s32 %v2103, %v2105
        %v2107 = vrot.slane %v2091, %v2106
        %v2109 = vunpack.c.l.s4 1966171168
        %v2110 = vunpack.c.0.s8 %v2109
        %v2111 = vlaneseq
        %v2112 = vshrl.u32 %v2111, 7
        %v2113 = vsub.s32 %v2110, %v2112
        %v2114 = vrot.slane %v2092, %v2113
        %v2116 = vunpack.c.l.s4 1966171168
        %v2117 = vunpack.c.0.s8 %v2116
        %v2118 = vlaneseq
        %v2119 = vshrl.u32 %v2118, 7
        %v2120 = vsub.s32 %v2117, %v2119
        %v2121 = vrot.slane %v2093, %v2120
        %v2122 = vcombine.low %v2100, %v2107
        %v2123 = vcombine.high %v2100, %v2107
        %v2124 = vcombine.low %v2114, %v2121
        %v2125 = vcombine.high %v2114, %v2121
        %v2127 = vunpack.c.l.s4 1966171168
        %v2128 = vunpack.c.0.s8 %v2127
        %v2129 = vlaneseq
        %v2130 = vshrl.u32 %v2129, 7
        %v2131 = vsub.s32 %v2128, %v2130
        %v2132 = vrot.slane %v2122, %v2131
        %v2134 = vunpack.c.l.s4 1966171168
        %v2135 = vunpack.c.0.s8 %v2134
        %v2136 = vlaneseq
        %v2137 = vshrl.u32 %v2136, 7
        %v2138 = vsub.s32 %v2135, %v2137
        %v2139 = vrot.slane %v2123, %v2138
        %v2141 = vunpack.c.l.s4 1966171168
        %v2142 = vunpack.c.0.s8 %v2141
        %v2143 = vlaneseq
        %v2144 = vshrl.u32 %v2143, 7
        %v2145 = vsub.s32 %v2142, %v2144
        %v2146 = vrot.slane %v2124, %v2145
        %v2148 = vunpack.c.l.s4 1966171168
        %v2149 = vunpack.c.0.s8 %v2148
        %v2150 = vlaneseq
        %v2151 = vshrl.u32 %v2150, 7
        %v2152 = vsub.s32 %v2149, %v2151
        %v2153 = vrot.slane %v2125, %v2152
        %v2154 = vcombine.low %v2132, %v2146
        %v2155 = vcombine.low %v2139, %v2153
        %v2158 = vadd.f32 %v2154, %v2155
        %2159 = vadd.xlane.f32.xlu0 %v2158
        %v2160 = vpop.xlane.xlu0 %2159
        %v2161 = vrot.slane %v2160, 4
        %v2162 = vadd.f32 %v2160, %v2161
        %v2163 = vrot.slane %v2162, 2
        %v2164 = vadd.f32 %v2162, %v2163
        %v2165 = vrot.slane %v2164, 1
        %v2166 = vadd.f32 %v2164, %v2165
        %s2167 = vtos %v2166
        %v2168 = vstv %s2167
        %s2169 = scalar_lea.vmem %s402, 3 [#allocation10]
        %v2170 = vld [vmem:[%s2169] ss:$8 sm:$0x3]
        %s2171 = scalar_lea.vmem %s402, 19 [#allocation10]
        %v2172 = vld [vmem:[%s2171] ss:$8 sm:$0x3]
        %s2173 = scalar_lea.vmem %s402, 35 [#allocation10]
        %v2174 = vld [vmem:[%s2173] ss:$8 sm:$0x3]
        %s2175 = scalar_lea.vmem %s402, 51 [#allocation10]
        %v2176 = vld [vmem:[%s2175] ss:$8 sm:$0x3]
        %s2177 = scalar_lea.vmem %s402, 67 [#allocation10]
        %v2178 = vld [vmem:[%s2177] ss:$8 sm:$0x3]
        %s2179 = scalar_lea.vmem %s402, 83 [#allocation10]
        %v2180 = vld [vmem:[%s2179] ss:$8 sm:$0x3]
        %s2181 = scalar_lea.vmem %s402, 99 [#allocation10]
        %v2182 = vld [vmem:[%s2181] ss:$8 sm:$0x3]
        %s2183 = scalar_lea.vmem %s402, 115 [#allocation10]
        %v2184 = vld [vmem:[%s2183] ss:$8 sm:$0x3]
        %vm2185 = vcmp.gt.f32.partialorder %v2170, 0.5
        %vm2186 = vcmp.gt.f32.partialorder %v2172, 0.5
        %vm2187 = vcmp.gt.f32.partialorder %v2174, 0.5
        %vm2188 = vcmp.gt.f32.partialorder %v2176, 0.5
        %vm2189 = vcmp.gt.f32.partialorder %v2178, 0.5
        %vm2190 = vcmp.gt.f32.partialorder %v2180, 0.5
        %vm2191 = vcmp.gt.f32.partialorder %v2182, 0.5
        %vm2192 = vcmp.gt.f32.partialorder %v2184, 0.5
        %v2193 = vsel %vm2185, %v1895, 0.0
        %v2194 = vsel %vm2186, %v1896, 0.0
        %v2195 = vsel %vm2187, %v1897, 0.0
        %v2196 = vsel %vm2188, %v1898, 0.0
        %v2197 = vsel %vm2189, %v1899, 0.0
        %v2198 = vsel %vm2190, %v1900, 0.0
        %v2199 = vsel %vm2191, %v1901, 0.0
        %v2200 = vsel %vm2192, %v1902, 0.0
        %v2209 = vcombine.low %v2193, %v2194
        %v2210 = vcombine.low %v2195, %v2196
        %v2211 = vcombine.low %v2197, %v2198
        %v2212 = vcombine.low %v2199, %v2200
        %v2214 = vunpack.c.l.s4 1966171168
        %v2215 = vunpack.c.0.s8 %v2214
        %v2216 = vlaneseq
        %v2217 = vshrl.u32 %v2216, 7
        %v2218 = vsub.s32 %v2215, %v2217
        %v2219 = vrot.slane %v2209, %v2218
        %v2221 = vunpack.c.l.s4 1966171168
        %v2222 = vunpack.c.0.s8 %v2221
        %v2223 = vlaneseq
        %v2224 = vshrl.u32 %v2223, 7
        %v2225 = vsub.s32 %v2222, %v2224
        %v2226 = vrot.slane %v2210, %v2225
        %v2228 = vunpack.c.l.s4 1966171168
        %v2229 = vunpack.c.0.s8 %v2228
        %v2230 = vlaneseq
        %v2231 = vshrl.u32 %v2230, 7
        %v2232 = vsub.s32 %v2229, %v2231
        %v2233 = vrot.slane %v2211, %v2232
        %v2235 = vunpack.c.l.s4 1966171168
        %v2236 = vunpack.c.0.s8 %v2235
        %v2237 = vlaneseq
        %v2238 = vshrl.u32 %v2237, 7
        %v2239 = vsub.s32 %v2236, %v2238
        %v2240 = vrot.slane %v2212, %v2239
        %v2241 = vcombine.low %v2219, %v2226
        %v2242 = vcombine.high %v2219, %v2226
        %v2243 = vcombine.low %v2233, %v2240
        %v2244 = vcombine.high %v2233, %v2240
        %v2246 = vunpack.c.l.s4 1966171168
        %v2247 = vunpack.c.0.s8 %v2246
        %v2248 = vlaneseq
        %v2249 = vshrl.u32 %v2248, 7
        %v2250 = vsub.s32 %v2247, %v2249
        %v2251 = vrot.slane %v2241, %v2250
        %v2253 = vunpack.c.l.s4 1966171168
        %v2254 = vunpack.c.0.s8 %v2253
        %v2255 = vlaneseq
        %v2256 = vshrl.u32 %v2255, 7
        %v2257 = vsub.s32 %v2254, %v2256
        %v2258 = vrot.slane %v2242, %v2257
        %v2260 = vunpack.c.l.s4 1966171168
        %v2261 = vunpack.c.0.s8 %v2260
        %v2262 = vlaneseq
        %v2263 = vshrl.u32 %v2262, 7
        %v2264 = vsub.s32 %v2261, %v2263
        %v2265 = vrot.slane %v2243, %v2264
        %v2267 = vunpack.c.l.s4 1966171168
        %v2268 = vunpack.c.0.s8 %v2267
        %v2269 = vlaneseq
        %v2270 = vshrl.u32 %v2269, 7
        %v2271 = vsub.s32 %v2268, %v2270
        %v2272 = vrot.slane %v2244, %v2271
        %v2273 = vcombine.low %v2251, %v2265
        %v2274 = vcombine.low %v2258, %v2272
        %v2277 = vadd.f32 %v2273, %v2274
        %2278 = vadd.xlane.f32.xlu0 %v2277
        %v2279 = vpop.xlane.xlu0 %2278
        %v2280 = vrot.slane %v2279, 4
        %v2281 = vadd.f32 %v2279, %v2280
        %v2282 = vrot.slane %v2281, 2
        %v2283 = vadd.f32 %v2281, %v2282
        %v2284 = vrot.slane %v2283, 1
        %v2285 = vadd.f32 %v2283, %v2284
        %s2286 = vtos %v2285
        %v2287 = vstv %s2286
        %s2288 = scalar_lea.vmem %s402, 4 [#allocation10]
        %v2289 = vld [vmem:[%s2288] ss:$8 sm:$0x3]
        %s2290 = scalar_lea.vmem %s402, 20 [#allocation10]
        %v2291 = vld [vmem:[%s2290] ss:$8 sm:$0x3]
        %s2292 = scalar_lea.vmem %s402, 36 [#allocation10]
        %v2293 = vld [vmem:[%s2292] ss:$8 sm:$0x3]
        %s2294 = scalar_lea.vmem %s402, 52 [#allocation10]
        %v2295 = vld [vmem:[%s2294] ss:$8 sm:$0x3]
        %s2296 = scalar_lea.vmem %s402, 68 [#allocation10]
        %v2297 = vld [vmem:[%s2296] ss:$8 sm:$0x3]
        %s2298 = scalar_lea.vmem %s402, 84 [#allocation10]
        %v2299 = vld [vmem:[%s2298] ss:$8 sm:$0x3]
        %s2300 = scalar_lea.vmem %s402, 100 [#allocation10]
        %v2301 = vld [vmem:[%s2300] ss:$8 sm:$0x3]
        %s2302 = scalar_lea.vmem %s402, 116 [#allocation10]
        %v2303 = vld [vmem:[%s2302] ss:$8 sm:$0x3]
        %vm2304 = vcmp.gt.f32.partialorder %v2289, 0.5
        %vm2305 = vcmp.gt.f32.partialorder %v2291, 0.5
        %vm2306 = vcmp.gt.f32.partialorder %v2293, 0.5
        %vm2307 = vcmp.gt.f32.partialorder %v2295, 0.5
        %vm2308 = vcmp.gt.f32.partialorder %v2297, 0.5
        %vm2309 = vcmp.gt.f32.partialorder %v2299, 0.5
        %vm2310 = vcmp.gt.f32.partialorder %v2301, 0.5
        %vm2311 = vcmp.gt.f32.partialorder %v2303, 0.5
        %v2312 = vsel %vm2304, %v1895, 0.0
        %v2313 = vsel %vm2305, %v1896, 0.0
        %v2314 = vsel %vm2306, %v1897, 0.0
        %v2315 = vsel %vm2307, %v1898, 0.0
        %v2316 = vsel %vm2308, %v1899, 0.0
        %v2317 = vsel %vm2309, %v1900, 0.0
        %v2318 = vsel %vm2310, %v1901, 0.0
        %v2319 = vsel %vm2311, %v1902, 0.0
        %v2328 = vcombine.low %v2312, %v2313
        %v2329 = vcombine.low %v2314, %v2315
        %v2330 = vcombine.low %v2316, %v2317
        %v2331 = vcombine.low %v2318, %v2319
        %v2333 = vunpack.c.l.s4 1966171168
        %v2334 = vunpack.c.0.s8 %v2333
        %v2335 = vlaneseq
        %v2336 = vshrl.u32 %v2335, 7
        %v2337 = vsub.s32 %v2334, %v2336
        %v2338 = vrot.slane %v2328, %v2337
        %v2340 = vunpack.c.l.s4 1966171168
        %v2341 = vunpack.c.0.s8 %v2340
        %v2342 = vlaneseq
        %v2343 = vshrl.u32 %v2342, 7
        %v2344 = vsub.s32 %v2341, %v2343
        %v2345 = vrot.slane %v2329, %v2344
        %v2347 = vunpack.c.l.s4 1966171168
        %v2348 = vunpack.c.0.s8 %v2347
        %v2349 = vlaneseq
        %v2350 = vshrl.u32 %v2349, 7
        %v2351 = vsub.s32 %v2348, %v2350
        %v2352 = vrot.slane %v2330, %v2351
        %v2354 = vunpack.c.l.s4 1966171168
        %v2355 = vunpack.c.0.s8 %v2354
        %v2356 = vlaneseq
        %v2357 = vshrl.u32 %v2356, 7
        %v2358 = vsub.s32 %v2355, %v2357
        %v2359 = vrot.slane %v2331, %v2358
        %v2360 = vcombine.low %v2338, %v2345
        %v2361 = vcombine.high %v2338, %v2345
        %v2362 = vcombine.low %v2352, %v2359
        %v2363 = vcombine.high %v2352, %v2359
        %v2365 = vunpack.c.l.s4 1966171168
        %v2366 = vunpack.c.0.s8 %v2365
        %v2367 = vlaneseq
        %v2368 = vshrl.u32 %v2367, 7
        %v2369 = vsub.s32 %v2366, %v2368
        %v2370 = vrot.slane %v2360, %v2369
        %v2372 = vunpack.c.l.s4 1966171168
        %v2373 = vunpack.c.0.s8 %v2372
        %v2374 = vlaneseq
        %v2375 = vshrl.u32 %v2374, 7
        %v2376 = vsub.s32 %v2373, %v2375
        %v2377 = vrot.slane %v2361, %v2376
        %v2379 = vunpack.c.l.s4 1966171168
        %v2380 = vunpack.c.0.s8 %v2379
        %v2381 = vlaneseq
        %v2382 = vshrl.u32 %v2381, 7
        %v2383 = vsub.s32 %v2380, %v2382
        %v2384 = vrot.slane %v2362, %v2383
        %v2386 = vunpack.c.l.s4 1966171168
        %v2387 = vunpack.c.0.s8 %v2386
        %v2388 = vlaneseq
        %v2389 = vshrl.u32 %v2388, 7
        %v2390 = vsub.s32 %v2387, %v2389
        %v2391 = vrot.slane %v2363, %v2390
        %v2392 = vcombine.low %v2370, %v2384
        %v2393 = vcombine.low %v2377, %v2391
        %v2396 = vadd.f32 %v2392, %v2393
        %2397 = vadd.xlane.f32.xlu0 %v2396
        %v2398 = vpop.xlane.xlu0 %2397
        %v2399 = vrot.slane %v2398, 4
        %v2400 = vadd.f32 %v2398, %v2399
        %v2401 = vrot.slane %v2400, 2
        %v2402 = vadd.f32 %v2400, %v2401
        %v2403 = vrot.slane %v2402, 1
        %v2404 = vadd.f32 %v2402, %v2403
        %s2405 = vtos %v2404
        %v2406 = vstv %s2405
        %s2407 = scalar_lea.vmem %s402, 5 [#allocation10]
        %v2408 = vld [vmem:[%s2407] ss:$8 sm:$0x3]
        %s2409 = scalar_lea.vmem %s402, 21 [#allocation10]
        %v2410 = vld [vmem:[%s2409] ss:$8 sm:$0x3]
        %s2411 = scalar_lea.vmem %s402, 37 [#allocation10]
        %v2412 = vld [vmem:[%s2411] ss:$8 sm:$0x3]
        %s2413 = scalar_lea.vmem %s402, 53 [#allocation10]
        %v2414 = vld [vmem:[%s2413] ss:$8 sm:$0x3]
        %s2415 = scalar_lea.vmem %s402, 69 [#allocation10]
        %v2416 = vld [vmem:[%s2415] ss:$8 sm:$0x3]
        %s2417 = scalar_lea.vmem %s402, 85 [#allocation10]
        %v2418 = vld [vmem:[%s2417] ss:$8 sm:$0x3]
        %s2419 = scalar_lea.vmem %s402, 101 [#allocation10]
        %v2420 = vld [vmem:[%s2419] ss:$8 sm:$0x3]
        %s2421 = scalar_lea.vmem %s402, 117 [#allocation10]
        %v2422 = vld [vmem:[%s2421] ss:$8 sm:$0x3]
        %vm2423 = vcmp.gt.f32.partialorder %v2408, 0.5
        %vm2424 = vcmp.gt.f32.partialorder %v2410, 0.5
        %vm2425 = vcmp.gt.f32.partialorder %v2412, 0.5
        %vm2426 = vcmp.gt.f32.partialorder %v2414, 0.5
        %vm2427 = vcmp.gt.f32.partialorder %v2416, 0.5
        %vm2428 = vcmp.gt.f32.partialorder %v2418, 0.5
        %vm2429 = vcmp.gt.f32.partialorder %v2420, 0.5
        %vm2430 = vcmp.gt.f32.partialorder %v2422, 0.5
        %v2431 = vsel %vm2423, %v1895, 0.0
        %v2432 = vsel %vm2424, %v1896, 0.0
        %v2433 = vsel %vm2425, %v1897, 0.0
        %v2434 = vsel %vm2426, %v1898, 0.0
        %v2435 = vsel %vm2427, %v1899, 0.0
        %v2436 = vsel %vm2428, %v1900, 0.0
        %v2437 = vsel %vm2429, %v1901, 0.0
        %v2438 = vsel %vm2430, %v1902, 0.0
        %v2447 = vcombine.low %v2431, %v2432
        %v2448 = vcombine.low %v2433, %v2434
        %v2449 = vcombine.low %v2435, %v2436
        %v2450 = vcombine.low %v2437, %v2438
        %v2452 = vunpack.c.l.s4 1966171168
        %v2453 = vunpack.c.0.s8 %v2452
        %v2454 = vlaneseq
        %v2455 = vshrl.u32 %v2454, 7
        %v2456 = vsub.s32 %v2453, %v2455
        %v2457 = vrot.slane %v2447, %v2456
        %v2459 = vunpack.c.l.s4 1966171168
        %v2460 = vunpack.c.0.s8 %v2459
        %v2461 = vlaneseq
        %v2462 = vshrl.u32 %v2461, 7
        %v2463 = vsub.s32 %v2460, %v2462
        %v2464 = vrot.slane %v2448, %v2463
        %v2466 = vunpack.c.l.s4 1966171168
        %v2467 = vunpack.c.0.s8 %v2466
        %v2468 = vlaneseq
        %v2469 = vshrl.u32 %v2468, 7
        %v2470 = vsub.s32 %v2467, %v2469
        %v2471 = vrot.slane %v2449, %v2470
        %v2473 = vunpack.c.l.s4 1966171168
        %v2474 = vunpack.c.0.s8 %v2473
        %v2475 = vlaneseq
        %v2476 = vshrl.u32 %v2475, 7
        %v2477 = vsub.s32 %v2474, %v2476
        %v2478 = vrot.slane %v2450, %v2477
        %v2479 = vcombine.low %v2457, %v2464
        %v2480 = vcombine.high %v2457, %v2464
        %v2481 = vcombine.low %v2471, %v2478
        %v2482 = vcombine.high %v2471, %v2478
        %v2484 = vunpack.c.l.s4 1966171168
        %v2485 = vunpack.c.0.s8 %v2484
        %v2486 = vlaneseq
        %v2487 = vshrl.u32 %v2486, 7
        %v2488 = vsub.s32 %v2485, %v2487
        %v2489 = vrot.slane %v2479, %v2488
        %v2491 = vunpack.c.l.s4 1966171168
        %v2492 = vunpack.c.0.s8 %v2491
        %v2493 = vlaneseq
        %v2494 = vshrl.u32 %v2493, 7
        %v2495 = vsub.s32 %v2492, %v2494
        %v2496 = vrot.slane %v2480, %v2495
        %v2498 = vunpack.c.l.s4 1966171168
        %v2499 = vunpack.c.0.s8 %v2498
        %v2500 = vlaneseq
        %v2501 = vshrl.u32 %v2500, 7
        %v2502 = vsub.s32 %v2499, %v2501
        %v2503 = vrot.slane %v2481, %v2502
        %v2505 = vunpack.c.l.s4 1966171168
        %v2506 = vunpack.c.0.s8 %v2505
        %v2507 = vlaneseq
        %v2508 = vshrl.u32 %v2507, 7
        %v2509 = vsub.s32 %v2506, %v2508
        %v2510 = vrot.slane %v2482, %v2509
        %v2511 = vcombine.low %v2489, %v2503
        %v2512 = vcombine.low %v2496, %v2510
        %v2515 = vadd.f32 %v2511, %v2512
        %2516 = vadd.xlane.f32.xlu0 %v2515
        %v2517 = vpop.xlane.xlu0 %2516
        %v2518 = vrot.slane %v2517, 4
        %v2519 = vadd.f32 %v2517, %v2518
        %v2520 = vrot.slane %v2519, 2
        %v2521 = vadd.f32 %v2519, %v2520
        %v2522 = vrot.slane %v2521, 1
        %v2523 = vadd.f32 %v2521, %v2522
        %s2524 = vtos %v2523
        %v2525 = vstv %s2524
        %s2526 = scalar_lea.vmem %s402, 6 [#allocation10]
        %v2527 = vld [vmem:[%s2526] ss:$8 sm:$0x3]
        %s2528 = scalar_lea.vmem %s402, 22 [#allocation10]
        %v2529 = vld [vmem:[%s2528] ss:$8 sm:$0x3]
        %s2530 = scalar_lea.vmem %s402, 38 [#allocation10]
        %v2531 = vld [vmem:[%s2530] ss:$8 sm:$0x3]
        %s2532 = scalar_lea.vmem %s402, 54 [#allocation10]
        %v2533 = vld [vmem:[%s2532] ss:$8 sm:$0x3]
        %s2534 = scalar_lea.vmem %s402, 70 [#allocation10]
        %v2535 = vld [vmem:[%s2534] ss:$8 sm:$0x3]
        %s2536 = scalar_lea.vmem %s402, 86 [#allocation10]
        %v2537 = vld [vmem:[%s2536] ss:$8 sm:$0x3]
        %s2538 = scalar_lea.vmem %s402, 102 [#allocation10]
        %v2539 = vld [vmem:[%s2538] ss:$8 sm:$0x3]
        %s2540 = scalar_lea.vmem %s402, 118 [#allocation10]
        %v2541 = vld [vmem:[%s2540] ss:$8 sm:$0x3]
        %vm2542 = vcmp.gt.f32.partialorder %v2527, 0.5
        %vm2543 = vcmp.gt.f32.partialorder %v2529, 0.5
        %vm2544 = vcmp.gt.f32.partialorder %v2531, 0.5
        %vm2545 = vcmp.gt.f32.partialorder %v2533, 0.5
        %vm2546 = vcmp.gt.f32.partialorder %v2535, 0.5
        %vm2547 = vcmp.gt.f32.partialorder %v2537, 0.5
        %vm2548 = vcmp.gt.f32.partialorder %v2539, 0.5
        %vm2549 = vcmp.gt.f32.partialorder %v2541, 0.5
        %v2550 = vsel %vm2542, %v1543, 0.0
        %v2551 = vsel %vm2543, %v1544, 0.0
        %v2552 = vsel %vm2544, %v1545, 0.0
        %v2553 = vsel %vm2545, %v1546, 0.0
        %v2554 = vsel %vm2546, %v1547, 0.0
        %v2555 = vsel %vm2547, %v1548, 0.0
        %v2556 = vsel %vm2548, %v1549, 0.0
        %v2557 = vsel %vm2549, %v1550, 0.0
        %v2566 = vcombine.low %v2550, %v2551
        %v2567 = vcombine.low %v2552, %v2553
        %v2568 = vcombine.low %v2554, %v2555
        %v2569 = vcombine.low %v2556, %v2557
        %v2571 = vunpack.c.l.s4 1966171168
        %v2572 = vunpack.c.0.s8 %v2571
        %v2573 = vlaneseq
        %v2574 = vshrl.u32 %v2573, 7
        %v2575 = vsub.s32 %v2572, %v2574
        %v2576 = vrot.slane %v2566, %v2575
        %v2578 = vunpack.c.l.s4 1966171168
        %v2579 = vunpack.c.0.s8 %v2578
        %v2580 = vlaneseq
        %v2581 = vshrl.u32 %v2580, 7
        %v2582 = vsub.s32 %v2579, %v2581
        %v2583 = vrot.slane %v2567, %v2582
        %v2585 = vunpack.c.l.s4 1966171168
        %v2586 = vunpack.c.0.s8 %v2585
        %v2587 = vlaneseq
        %v2588 = vshrl.u32 %v2587, 7
        %v2589 = vsub.s32 %v2586, %v2588
        %v2590 = vrot.slane %v2568, %v2589
        %v2592 = vunpack.c.l.s4 1966171168
        %v2593 = vunpack.c.0.s8 %v2592
        %v2594 = vlaneseq
        %v2595 = vshrl.u32 %v2594, 7
        %v2596 = vsub.s32 %v2593, %v2595
        %v2597 = vrot.slane %v2569, %v2596
        %v2598 = vcombine.low %v2576, %v2583
        %v2599 = vcombine.high %v2576, %v2583
        %v2600 = vcombine.low %v2590, %v2597
        %v2601 = vcombine.high %v2590, %v2597
        %v2603 = vunpack.c.l.s4 1966171168
        %v2604 = vunpack.c.0.s8 %v2603
        %v2605 = vlaneseq
        %v2606 = vshrl.u32 %v2605, 7
        %v2607 = vsub.s32 %v2604, %v2606
        %v2608 = vrot.slane %v2598, %v2607
        %v2610 = vunpack.c.l.s4 1966171168
        %v2611 = vunpack.c.0.s8 %v2610
        %v2612 = vlaneseq
        %v2613 = vshrl.u32 %v2612, 7
        %v2614 = vsub.s32 %v2611, %v2613
        %v2615 = vrot.slane %v2599, %v2614
        %v2617 = vunpack.c.l.s4 1966171168
        %v2618 = vunpack.c.0.s8 %v2617
        %v2619 = vlaneseq
        %v2620 = vshrl.u32 %v2619, 7
        %v2621 = vsub.s32 %v2618, %v2620
        %v2622 = vrot.slane %v2600, %v2621
        %v2624 = vunpack.c.l.s4 1966171168
        %v2625 = vunpack.c.0.s8 %v2624
        %v2626 = vlaneseq
        %v2627 = vshrl.u32 %v2626, 7
        %v2628 = vsub.s32 %v2625, %v2627
        %v2629 = vrot.slane %v2601, %v2628
        %v2630 = vcombine.low %v2608, %v2622
        %v2631 = vcombine.low %v2615, %v2629
        %v2634 = vadd.f32 %v2630, %v2631
        %2635 = vadd.xlane.f32.xlu0 %v2634
        %v2636 = vpop.xlane.xlu0 %2635
        %v2637 = vrot.slane %v2636, 4
        %v2638 = vadd.f32 %v2636, %v2637
        %v2639 = vrot.slane %v2638, 2
        %v2640 = vadd.f32 %v2638, %v2639
        %v2641 = vrot.slane %v2640, 1
        %v2642 = vadd.f32 %v2640, %v2641
        %s2643 = vtos %v2642
        %v2644 = vstv %s2643
        %s2645 = scalar_lea.vmem %s402, 7 [#allocation10]
        %v2646 = vld [vmem:[%s2645] ss:$8 sm:$0x3]
        %s2647 = scalar_lea.vmem %s402, 23 [#allocation10]
        %v2648 = vld [vmem:[%s2647] ss:$8 sm:$0x3]
        %s2649 = scalar_lea.vmem %s402, 39 [#allocation10]
        %v2650 = vld [vmem:[%s2649] ss:$8 sm:$0x3]
        %s2651 = scalar_lea.vmem %s402, 55 [#allocation10]
        %v2652 = vld [vmem:[%s2651] ss:$8 sm:$0x3]
        %s2653 = scalar_lea.vmem %s402, 71 [#allocation10]
        %v2654 = vld [vmem:[%s2653] ss:$8 sm:$0x3]
        %s2655 = scalar_lea.vmem %s402, 87 [#allocation10]
        %v2656 = vld [vmem:[%s2655] ss:$8 sm:$0x3]
        %s2657 = scalar_lea.vmem %s402, 103 [#allocation10]
        %v2658 = vld [vmem:[%s2657] ss:$8 sm:$0x3]
        %s2659 = scalar_lea.vmem %s402, 119 [#allocation10]
        %v2660 = vld [vmem:[%s2659] ss:$8 sm:$0x3]
        %vm2661 = vcmp.gt.f32.partialorder %v2646, 0.5
        %vm2662 = vcmp.gt.f32.partialorder %v2648, 0.5
        %vm2663 = vcmp.gt.f32.partialorder %v2650, 0.5
        %vm2664 = vcmp.gt.f32.partialorder %v2652, 0.5
        %vm2665 = vcmp.gt.f32.partialorder %v2654, 0.5
        %vm2666 = vcmp.gt.f32.partialorder %v2656, 0.5
        %vm2667 = vcmp.gt.f32.partialorder %v2658, 0.5
        %vm2668 = vcmp.gt.f32.partialorder %v2660, 0.5
        %v2669 = vsel %vm2661, %v1679, 0.0
        %v2670 = vsel %vm2662, %v1680, 0.0
        %v2671 = vsel %vm2663, %v1681, 0.0
        %v2672 = vsel %vm2664, %v1682, 0.0
        %v2673 = vsel %vm2665, %v1683, 0.0
        %v2674 = vsel %vm2666, %v1684, 0.0
        %v2675 = vsel %vm2667, %v1685, 0.0
        %v2676 = vsel %vm2668, %v1686, 0.0
        %v2685 = vcombine.low %v2669, %v2670
        %v2686 = vcombine.low %v2671, %v2672
        %v2687 = vcombine.low %v2673, %v2674
        %v2688 = vcombine.low %v2675, %v2676
        %v2690 = vunpack.c.l.s4 1966171168
        %v2691 = vunpack.c.0.s8 %v2690
        %v2692 = vlaneseq
        %v2693 = vshrl.u32 %v2692, 7
        %v2694 = vsub.s32 %v2691, %v2693
        %v2695 = vrot.slane %v2685, %v2694
        %v2697 = vunpack.c.l.s4 1966171168
        %v2698 = vunpack.c.0.s8 %v2697
        %v2699 = vlaneseq
        %v2700 = vshrl.u32 %v2699, 7
        %v2701 = vsub.s32 %v2698, %v2700
        %v2702 = vrot.slane %v2686, %v2701
        %v2704 = vunpack.c.l.s4 1966171168
        %v2705 = vunpack.c.0.s8 %v2704
        %v2706 = vlaneseq
        %v2707 = vshrl.u32 %v2706, 7
        %v2708 = vsub.s32 %v2705, %v2707
        %v2709 = vrot.slane %v2687, %v2708
        %v2711 = vunpack.c.l.s4 1966171168
        %v2712 = vunpack.c.0.s8 %v2711
        %v2713 = vlaneseq
        %v2714 = vshrl.u32 %v2713, 7
        %v2715 = vsub.s32 %v2712, %v2714
        %v2716 = vrot.slane %v2688, %v2715
        %v2717 = vcombine.low %v2695, %v2702
        %v2718 = vcombine.high %v2695, %v2702
        %v2719 = vcombine.low %v2709, %v2716
        %v2720 = vcombine.high %v2709, %v2716
        %v2722 = vunpack.c.l.s4 1966171168
        %v2723 = vunpack.c.0.s8 %v2722
        %v2724 = vlaneseq
        %v2725 = vshrl.u32 %v2724, 7
        %v2726 = vsub.s32 %v2723, %v2725
        %v2727 = vrot.slane %v2717, %v2726
        %v2729 = vunpack.c.l.s4 1966171168
        %v2730 = vunpack.c.0.s8 %v2729
        %v2731 = vlaneseq
        %v2732 = vshrl.u32 %v2731, 7
        %v2733 = vsub.s32 %v2730, %v2732
        %v2734 = vrot.slane %v2718, %v2733
        %v2736 = vunpack.c.l.s4 1966171168
        %v2737 = vunpack.c.0.s8 %v2736
        %v2738 = vlaneseq
        %v2739 = vshrl.u32 %v2738, 7
        %v2740 = vsub.s32 %v2737, %v2739
        %v2741 = vrot.slane %v2719, %v2740
        %v2743 = vunpack.c.l.s4 1966171168
        %v2744 = vunpack.c.0.s8 %v2743
        %v2745 = vlaneseq
        %v2746 = vshrl.u32 %v2745, 7
        %v2747 = vsub.s32 %v2744, %v2746
        %v2748 = vrot.slane %v2720, %v2747
        %v2749 = vcombine.low %v2727, %v2741
        %v2750 = vcombine.low %v2734, %v2748
        %v2753 = vadd.f32 %v2749, %v2750
        %2754 = vadd.xlane.f32.xlu0 %v2753
        %v2755 = vpop.xlane.xlu0 %2754
        %v2756 = vrot.slane %v2755, 4
        %v2757 = vadd.f32 %v2755, %v2756
        %v2758 = vrot.slane %v2757, 2
        %v2759 = vadd.f32 %v2757, %v2758
        %v2760 = vrot.slane %v2759, 1
        %v2761 = vadd.f32 %v2759, %v2760
        %s2762 = vtos %v2761
        %v2763 = vstv %s2762
        %vm2764 = vcmask 1040384
        %v2765 = vsel %vm2764, %v2049, %v2168
        %vm2766 = vcmask 1041408
        %v2767 = vsel %vm2766, %v2765, %v2287
        %vm2768 = vcmask 1042432
        %v2769 = vsel %vm2768, %v2767, %v2406
        %vm2770 = vcmask 1043456
        %v2771 = vsel %vm2770, %v2769, %v2525
        %vm2772 = vcmask 1044480
        %v2773 = vsel %vm2772, %v2771, %v2644
        %vm2774 = vcmask 1045504
        %v2775 = vsel %vm2774, %v2773, %v2763
        %vm2776 = vcmask 1046528
        %v2777 = vsel %vm2776, %v2775, 0.0
        %v2778 = vstv %s462
        %v2779 = vmul.f32 %v2777, %v2778
        %vm2780 = vcmask 7168
        %2781 = vst.msk [vmem:[%s455] sm:$0xff] %vm2780, %v2779
        %s2782 = sand.u32 %s175, 1
        %s2783 = scalar_lea.sflag [#allocation4], %s2782
        %s2784 = sand.u32 %s175, 1
        %s2785 = smul.addr %s2784, 16
        %s2786 = scalar_lea.vmem [#allocation11], %s2785
        %s2787 = sand.u32 %s32, 1
        %s2788 = scalar_lea.sflag [#allocation13], %s2787
        %s2789 = sand.u32 %s203, 1
        %s2790 = smul.addr %s2789, 16
        %s2791 = scalar_lea.vmem [#allocation12], %s2790
        %s2792 = sand.u32 %s32, 1
        %s2793 = scalar_lea.sflag [#allocation13], %s2792
        %s2794 = sand.u32 %s231, 1
        %s2795 = smul.addr %s2794, 16
        %s2796 = scalar_lea.vmem [#allocation14], %s2795
        %s2797 = sand.u32 %s259, 1
        %s2798 = scalar_lea.sflag [#allocation16], %s2797
        %s2799 = sand.u32 %s259, 1
        %s2800 = smul.addr %s2799, 8
        %s2801 = scalar_lea.vmem [#allocation15], %s2800
        // Predicated region
        $region61: #{tpu_custom_call.1} parent=39 // pred_check
          %p2802 = pneg %p185
        $region62: #{tpu_custom_call.1} parent=39 // pred_check_branch
          %2804 = sbr.rel (%p2802) target = $region64
        $region63: #{tpu_custom_call.1} parent=39 // pred_region
          %s2805 = smul.u32 8, %s36
          %s2807 = ssub.s32 256, 256
          %2808 = vsyncadd %s2783, %s2807
          %s2809 = smul.addr %s37, 2
          %s2810 = smul.addr %s2805, 16
          %s2811 = sadd.s32 %s2809, %s2810
          %s2812 = smul.addr %s2811, 16
          %s2813 = scalar_lea.hbm %s5, %s2812
          %s2814 = sshll.u32 %s2786, 4
          %s2815 = int_to_ptr.vmem [resolvable:$true] %s2814
          %2820 = dma.vmem_to_hbm [thread:$0]  %s2815, 256, %s2813, %s2783, 32, 256, 2
        $region64: #{tpu_custom_call.1} parent=39 // pred_fallthru
          _
        // Predicated region
        $region65: #{tpu_custom_call.1} parent=39 // pred_check
          %p2821 = pneg %p213
        $region66: #{tpu_custom_call.1} parent=39 // pred_check_branch
          %2823 = sbr.rel (%p2821) target = $region68
        $region67: #{tpu_custom_call.1} parent=39 // pred_region
          %s2824 = smul.u32 8, %s36
          %s2826 = ssub.s32 256, 256
          %2827 = vsyncadd %s2788, %s2826
          %s2828 = smul.addr %s37, 2
          %s2829 = smul.addr %s2824, 16
          %s2830 = sadd.s32 %s2828, %s2829
          %s2831 = smul.addr %s2830, 16
          %s2832 = scalar_lea.hbm %s6, %s2831
          %s2833 = sshll.u32 %s2791, 4
          %s2834 = int_to_ptr.vmem [resolvable:$true] %s2833
          %2839 = dma.vmem_to_hbm [thread:$0]  %s2834, 256, %s2832, %s2788, 32, 256, 2
        $region68: #{tpu_custom_call.1} parent=39 // pred_fallthru
          _
        // Predicated region
        $region69: #{tpu_custom_call.1} parent=39 // pred_check
          %p2840 = pneg %p241
        $region70: #{tpu_custom_call.1} parent=39 // pred_check_branch
          %2842 = sbr.rel (%p2840) target = $region72
        $region71: #{tpu_custom_call.1} parent=39 // pred_region
          %s2843 = smul.u32 8, %s36
          %s2845 = ssub.s32 256, 256
          %2846 = vsyncadd %s2793, %s2845
          %s2847 = smul.addr %s37, 2
          %s2848 = smul.addr %s2843, 16
          %s2849 = sadd.s32 %s2847, %s2848
          %s2850 = smul.addr %s2849, 16
          %s2851 = scalar_lea.hbm %s7, %s2850
          %s2852 = sshll.u32 %s2796, 4
          %s2853 = int_to_ptr.vmem [resolvable:$true] %s2852
          %2858 = dma.vmem_to_hbm [thread:$0]  %s2853, 256, %s2851, %s2793, 32, 256, 2
        $region72: #{tpu_custom_call.1} parent=39 // pred_fallthru
          _
        // Predicated region
        $region73: #{tpu_custom_call.1} parent=39 // pred_check
          %p2859 = pneg %p269
        $region74: #{tpu_custom_call.1} parent=39 // pred_check_branch
          %2861 = sbr.rel (%p2859) target = $region76
        $region75: #{tpu_custom_call.1} parent=39 // pred_region
          %s2863 = ssub.s32 128, 128
          %2864 = vsyncadd %s2798, %s2863
          %s2865 = smul.addr %s36, 8
          %s2866 = sadd.s32 %s37, %s2865
          %s2867 = smul.addr %s2866, 128
          %s2868 = scalar_lea.hbm %s8, %s2867
          %s2870 = sshll.u32 %s2801, 4
          %s2871 = int_to_ptr.vmem [resolvable:$true] %s2870
          %2873 = dma.vmem_to_hbm [thread:$0]  %s2871, 128, %s2868, %s2798
        $region76: #{tpu_custom_call.1} parent=39 // pred_fallthru
          _
      $region40: #{tpu_custom_call.1} parent=5 // pred_fallthru
        _
      %p2874 = scmp.le.s32.totalorder 2, %s27
      // Predicated region
      $region77: #{tpu_custom_call.1} parent=5 // pred_check
        %p2875 = pneg %p2874
      $region78: #{tpu_custom_call.1} parent=5 // pred_check_branch
        %2877 = sbr.rel (%p2875) target = $region80
      $region79: #{tpu_custom_call.1} parent=5 // pred_region
        %s2878 = ssub.s32 %s27, 2
        // Predicated region
        $region81: #{tpu_custom_call.1} parent=79 // pred_check
          %p2879 = pneg %p191
        $region82: #{tpu_custom_call.1} parent=79 // pred_check_branch
          %2881 = sbr.rel (%p2879) target = $region84
        $region83: #{tpu_custom_call.1} parent=79 // pred_region
          %s2882 = sand.u32 %s176, 1
          %s2883 = scalar_lea.sflag [#allocation4], %s2882
          %s2884 = sand.u32 %s176, 1
          %s2885 = smul.addr %s2884, 16
          %s2886 = scalar_lea.vmem [#allocation11], %s2885
          %2887 = dma.done %s2883, 256
        $region84: #{tpu_custom_call.1} parent=79 // pred_fallthru
          _
        // Predicated region
        $region85: #{tpu_custom_call.1} parent=79 // pred_check
          %p2888 = pneg %p219
        $region86: #{tpu_custom_call.1} parent=79 // pred_check_branch
          %2890 = sbr.rel (%p2888) target = $region88
        $region87: #{tpu_custom_call.1} parent=79 // pred_region
          %s2891 = sand.u32 %s33, 1
          %s2892 = scalar_lea.sflag [#allocation13], %s2891
          %s2893 = sand.u32 %s204, 1
          %s2894 = smul.addr %s2893, 16
          %s2895 = scalar_lea.vmem [#allocation12], %s2894
          %2896 = dma.done %s2892, 256
        $region88: #{tpu_custom_call.1} parent=79 // pred_fallthru
          _
        // Predicated region
        $region89: #{tpu_custom_call.1} parent=79 // pred_check
          %p2897 = pneg %p247
        $region90: #{tpu_custom_call.1} parent=79 // pred_check_branch
          %2899 = sbr.rel (%p2897) target = $region92
        $region91: #{tpu_custom_call.1} parent=79 // pred_region
          %s2900 = sand.u32 %s33, 1
          %s2901 = scalar_lea.sflag [#allocation13], %s2900
          %s2902 = sand.u32 %s232, 1
          %s2903 = smul.addr %s2902, 16
          %s2904 = scalar_lea.vmem [#allocation14], %s2903
          %2905 = dma.done %s2901, 256
        $region92: #{tpu_custom_call.1} parent=79 // pred_fallthru
          _
        // Predicated region
        $region93: #{tpu_custom_call.1} parent=79 // pred_check
          %p2906 = pneg %p275
        $region94: #{tpu_custom_call.1} parent=79 // pred_check_branch
          %2908 = sbr.rel (%p2906) target = $region96
        $region95: #{tpu_custom_call.1} parent=79 // pred_region
          %s2909 = sand.u32 %s260, 1
          %s2910 = scalar_lea.sflag [#allocation16], %s2909
          %s2911 = sand.u32 %s260, 1
          %s2912 = smul.addr %s2911, 8
          %s2913 = scalar_lea.vmem [#allocation15], %s2912
          %2914 = dma.done %s2910, 128
        $region96: #{tpu_custom_call.1} parent=79 // pred_fallthru
          _
      $region80: #{tpu_custom_call.1} parent=5 // pred_fallthru
        _
    $region6: #{tpu_custom_call.1} parent=1 // loop_footer
      %s31 = sadd.s32 1, %s27
    $region7: #{tpu_custom_call.1} parent=1 // loop_footer_branch
      %26 = sbr.rel target = $region3
    $region8: #{tpu_custom_call.1} parent=1 // loop_exit
      _
    %2915 = vsyncpa [#allocation3], 1
    %s2916 = scalar_lea.sflag [#allocation3], 1
    %2917 = vsyncpa %s2916, 1
    %2918 = vsyncpa [#allocation8], 1
    %2919 = vsyncpa [#allocation4], 1
    %s2920 = scalar_lea.sflag [#allocation4], 1
    %2921 = vsyncpa %s2920, 1
    %2922 = vsyncpa [#allocation13], 1
    %s2923 = scalar_lea.sflag [#allocation13], 1
    %2924 = vsyncpa %s2923, 1
    %2925 = vsyncpa [#allocation16], 1
    %s2926 = scalar_lea.sflag [#allocation16], 1
    %2927 = vsyncpa %s2926, 1
    %2928 = vsyncpa [#allocation5], 1
    %s2929 = scalar_lea.sflag [#allocation5], 1
    %2930 = vsyncpa %s2929, 1

</llo_original>
